<compile_context>
chip_gen: v5e
topology: v5e:2x2
jax: 0.10.0
libtpu: 0.0.40
codegen_flags: <defaults>
</compile_context>

<pallas_src>
import functools

import numpy as np
import jax
import jax.numpy as jnp
from jax.experimental import pallas as pl
from jax.experimental.pallas import tpu as pltpu

EPS = 1e-5                      # nn.LayerNorm default eps
_INV_SQRT2 = 0.7071067811865476
_NEG_BIG = -1e30


def _layernorm(x, gamma, beta):
    mu = jnp.mean(x, axis=-1, keepdims=True)
    var = jnp.mean((x - mu) ** 2, axis=-1, keepdims=True)   # biased var (torch)
    return (x - mu) * jax.lax.rsqrt(var + EPS) * gamma + beta


def _gelu_exact(x):
    # F.gelu default = exact (erf) gelu
    return 0.5 * x * (1.0 + jax.lax.erf(x * _INV_SQRT2))


# ---------------------------------------------------------------------------
# Fused kernel: grid axis 0 = transformer layer
# ---------------------------------------------------------------------------
def _fused_kernel(x_ref, pos_ref, mask_ref, sel_ref,
                  pre_g_ref, pre_b_ref, wqkvc_ref, bqkvc_ref, wpc_ref, bp_ref,
                  n1g_ref, n1b_ref, w1_ref, b1_ref, w2_ref, b2_ref,
                  ng_ref, nb_ref, pw_ref, pb_ref, fw_ref, fb_ref,
                  out_ref, resid_ref, *, B, N, C, H):
    hd = C // H
    BN = B * N
    layer = pl.program_id(0)

    # layer 0: seed the VMEM-resident residual stream with x + positional emb
    @pl.when(layer == 0)
    def _():
        resid_ref[...] = x_ref[...] + jnp.concatenate([pos_ref[...]] * B, axis=0)

    x = resid_ref[...]                                        # (B*N, C)

    # ---- pre-LayerNorm + Q/K/V projections --------------------------------
    xn = _layernorm(x, pre_g_ref[...], pre_b_ref[...])

    # Each (tensor, column-chunk) projection is emitted directly into the
    # row-stacked "(chunk, batch, row)" layout used by the masked attention
    # below (PyTorch's q.reshape(B, H, N, C//H) split is a pure re-chunking of
    # contiguous hd-wide column windows).  1/sqrt(hd) is folded into wq/bq.
    def stacked_proj(t):                                      # t: 0=q, 1=k, 2=v
        return jnp.concatenate(
            [jnp.dot(xn, wqkvc_ref[t * H + c], preferred_element_type=jnp.float32)
             + bqkvc_ref[t * H + c]
             for c in range(H)], axis=0)                      # (H*B*N, hd)

    q2 = stacked_proj(0)
    k2 = stacked_proj(1)
    v2 = stacked_proj(2)

    # ---- all (batch, head) attention groups as one dense masked matmul ----
    s = jax.lax.dot_general(q2, k2, (((1,), (1,)), ((), ())),
                            preferred_element_type=jnp.float32)   # (HBN, HBN)
    s = s + mask_ref[...]                                     # -1e30 off-group
    s = s - jnp.max(s, axis=-1, keepdims=True)
    e = jnp.exp(s)
    p = e * pl.reciprocal(jnp.sum(e, axis=-1, keepdims=True), approx=True)
    o2 = jnp.dot(p, v2, preferred_element_type=jnp.float32)       # (HBN, hd)

    # ---- un-permute rows (constant 0/1 matmul) + output projection --------
    o_sel = jnp.dot(sel_ref[...], o2, preferred_element_type=jnp.float32)
    mha = bp_ref[...] + jnp.dot(o_sel[0:BN, :], wpc_ref[0],
                                preferred_element_type=jnp.float32)
    for h in range(1, H):
        mha = mha + jnp.dot(o_sel[h * BN:(h + 1) * BN, :], wpc_ref[h],
                            preferred_element_type=jnp.float32)   # (B*N, C)

    # ---- residual 1, post-norm, GELU MLP, residual 2 -----------------------
    out = x + mha
    outn = _layernorm(out, n1g_ref[...], n1b_ref[...])
    h1 = _gelu_exact(jnp.dot(outn, w1_ref[...],
                             preferred_element_type=jnp.float32) + b1_ref[...])
    out2 = jnp.dot(h1, w2_ref[...], preferred_element_type=jnp.float32) + b2_ref[...]
    new_x = outn + out2              # residual taken from the post-norm value (as in module)
    resid_ref[...] = new_x

    # ---- classifier head fused into the last layer step --------------------
    @pl.when(layer == pl.num_programs(0) - 1)
    def _():
        y = _layernorm(new_x, ng_ref[...], nb_ref[...])                      # (BN, C)
        sp = jnp.sum(y * pw_ref[...], axis=-1, keepdims=True) + pb_ref[...]  # (BN, 1)
        pooled = []
        for b in range(B):
            sb = sp[b * N:(b + 1) * N, :]
            yb = y[b * N:(b + 1) * N, :]
            eb = jnp.exp(sb - jnp.max(sb, axis=0, keepdims=True))
            wgt = eb * pl.reciprocal(jnp.sum(eb, axis=0, keepdims=True), approx=True)
            pooled.append(jnp.sum(wgt * yb, axis=0, keepdims=True))          # (1, C)
        pooled = jnp.concatenate(pooled, axis=0)                             # (B, C)
        out_ref[...] = (jnp.dot(pooled, fw_ref[...],
                                preferred_element_type=jnp.float32) + fb_ref[...])


# ---------------------------------------------------------------------------
# Constant attention mask / permutation (trace-time numpy, shapes are static)
# ---------------------------------------------------------------------------
def _attention_constants(B, N, H):
    BN, G = B * N, H * B * N
    rph = N // H                                   # rows of the (N, C) block per head
    rid = np.arange(G)
    gid = (rid % BN) // rph                        # (batch, head) group id per stacked row
    mask = np.where(gid[:, None] == gid[None, :], 0.0, _NEG_BIG).astype(np.float32)

    sel = np.zeros((G, G), dtype=np.float32)       # out_stacked = sel @ o2
    for h in range(H):
        for b in range(B):
            for n in range(N):
                row = h * BN + b * N + n
                col = (n % H) * BN + b * N + h * rph + n // H
                sel[row, col] = 1.0
    return jnp.asarray(mask), jnp.asarray(sel)


# ---------------------------------------------------------------------------
# Forward pass wrapper
# ---------------------------------------------------------------------------
def transformer_classifier(x, kp, *, num_heads, num_classes):
    B, N, C = x.shape
    H = num_heads
    assert C % H == 0 and N % H == 0, "kernel requires H | C and H | N"
    L = kp["wqkvc"].shape[0]
    BN = B * N
    KP = kp["fc_w"].shape[1]

    mask, sel = _attention_constants(B, N, H)
    x_slab = x.reshape(BN, C)

    def const_spec(a):
        zeros = (0,) * a.ndim
        return pl.BlockSpec(a.shape, lambda l: zeros)

    def layer_spec(a):
        zeros = (0,) * (a.ndim - 1)
        return pl.BlockSpec((None,) + a.shape[1:], lambda l: (l,) + zeros)

    layer_keys = ("pre_g", "pre_b", "wqkvc", "bqkvc", "wpc", "bp",
                  "n1_g", "n1_b", "w1", "b1", "w2", "b2")
    head_keys = ("norm_g", "norm_b", "pool_w", "pool_b", "fc_w", "fc_b")

    inputs = ([x_slab, kp["pos"], mask, sel]
              + [kp[k] for k in layer_keys]
              + [kp[k] for k in head_keys])
    in_specs = ([const_spec(a) for a in (x_slab, kp["pos"], mask, sel)]
                + [layer_spec(kp[k]) for k in layer_keys]
                + [const_spec(kp[k]) for k in head_keys])

    logits = pl.pallas_call(
        functools.partial(_fused_kernel, B=B, N=N, C=C, H=H),
        grid=(L,),
        in_specs=in_specs,
        out_specs=pl.BlockSpec((B, KP), lambda l: (0, 0)),
        out_shape=jax.ShapeDtypeStruct((B, KP), jnp.float32),
        scratch_shapes=[pltpu.VMEM((BN, C), jnp.float32)],
        compiler_params=pltpu.CompilerParams(dimension_semantics=("arbitrary",)),
    )(*inputs)
    return logits[:, :num_classes]                 # drop the lane padding


# ---------------------------------------------------------------------------
# Parameter packing: stack per-layer weights, pre-split qkv/proj per head
# chunk, fold 1/sqrt(hd) into q, pad the classifier to a lane-dense width.
# ---------------------------------------------------------------------------
def _pack_params(params, num_heads, num_classes):
    blocks = params["blocks"]
    C = params["norm_g"].shape[-1]
    H = num_heads
    hd = C // H
    inv_scale = 1.0 / float(hd ** 0.5)

    def stk(key):
        return jnp.stack([blk[key] for blk in blocks], axis=0)

    wqkvc, bqkvc, wpc = [], [], []
    for blk in blocks:
        ws, bs = [], []
        for w, bia, scl in ((blk["wq"], blk["bq"], inv_scale),
                            (blk["wk"], blk["bk"], 1.0),
                            (blk["wv"], blk["bv"], 1.0)):
            for c in range(H):
                ws.append(w[:, c * hd:(c + 1) * hd] * scl)       # (C, hd)
                bs.append(bia[:, c * hd:(c + 1) * hd] * scl)     # (1, hd)
        wqkvc.append(jnp.stack(ws, axis=0))                      # (3H, C, hd)
        bqkvc.append(jnp.stack(bs, axis=0))                      # (3H, 1, hd)
        wpc.append(jnp.stack([blk["wp"][h * hd:(h + 1) * hd, :]
                              for h in range(H)], axis=0))       # (H, hd, C)

    KP = max(128, ((num_classes + 127) // 128) * 128)
    fc_w = jnp.zeros((C, KP), jnp.float32).at[:, :num_classes].set(params["fc_w"])
    fc_b = jnp.zeros((1, KP), jnp.float32).at[:, :num_classes].set(params["fc_b"])

    return {
        "pos": params["pos"][0],                                 # (N, C)
        "pre_g": stk("pre_g"), "pre_b": stk("pre_b"),
        "wqkvc": jnp.stack(wqkvc, 0), "bqkvc": jnp.stack(bqkvc, 0),
        "wpc": jnp.stack(wpc, 0), "bp": stk("bp"),
        "n1_g": stk("n1_g"), "n1_b": stk("n1_b"),
        "w1": stk("w1"), "b1": stk("b1"),
        "w2": stk("w2"), "b2": stk("b2"),
        "norm_g": params["norm_g"], "norm_b": params["norm_b"],
        "pool_w": params["pool_w"], "pool_b": params["pool_b"],
        "fc_w": fc_w, "fc_b": fc_b,
    }


# ---------------------------------------------------------------------------
# Pure-JAX reference of the PyTorch forward (for in-script verification)
# ---------------------------------------------------------------------------
def reference_forward(x, params, *, num_heads):
    B, N, C = x.shape
    hd = C // num_heads
    x = x + params["pos"]
    for lp in params["blocks"]:
        xn = _layernorm(x, lp["pre_g"], lp["pre_b"])
        q = (xn @ lp["wq"] + lp["bq"]).reshape(B, num_heads, N, hd)
        k = (xn @ lp["wk"] + lp["bk"]).reshape(B, num_heads, N, hd)
        v = (xn @ lp["wv"] + lp["bv"]).reshape(B, num_heads, N, hd)
        s = jnp.einsum("bhid,bhjd->bhij", q, k) / (hd ** 0.5)
        p = jax.nn.softmax(s, axis=-1)
        o = jnp.einsum("bhij,bhjd->bhid", p, v)
        o = o.transpose(0, 2, 1, 3).reshape(B, N, C)
        mha = o @ lp["wp"] + lp["bp"]
        out = x + mha
        outn = _layernorm(out, lp["n1_g"], lp["n1_b"])
        h1 = _gelu_exact(outn @ lp["w1"] + lp["b1"])
        x = outn + (h1 @ lp["w2"] + lp["b2"])
    y = _layernorm(x, params["norm_g"], params["norm_b"])
    sp = jnp.einsum("bnc,kc->bnk", y, params["pool_w"]) + params["pool_b"]
    w = jax.nn.softmax(sp, axis=1)
    pooled = jnp.einsum("bnk,bnc->bc", w, y)
    return pooled @ params["fc_w"] + params["fc_b"]


# ---------------------------------------------------------------------------
# Deterministic synthetic parameters (shapes follow the PyTorch __init__;
# Linear weights are stored pre-transposed as (in, out) so the math is x @ W + b)
# ---------------------------------------------------------------------------
def init_params(key, *, dim, num_layers, num_classes, seq_len):
    ff = int(dim * 3)
    keys = iter(jax.random.split(key, 8 + 12 * num_layers))

    def nrm(shape, std=0.02):
        return (std * jax.random.normal(next(keys), shape)).astype(jnp.float32)

    params = {
        "pos": (0.2 * jax.random.truncated_normal(
            next(keys), -2.0, 2.0, (1, seq_len, dim))).astype(jnp.float32),
        "norm_g": jnp.ones((1, dim), jnp.float32),
        "norm_b": jnp.zeros((1, dim), jnp.float32),
        "pool_w": nrm((1, dim)),                 # sequence_pooling: Linear(dim, 1)
        "pool_b": nrm((1, 1)),
        "fc_w": nrm((dim, num_classes)),
        "fc_b": nrm((1, num_classes)),
        "blocks": [],
    }
    for _ in range(num_layers):
        params["blocks"].append({
            "pre_g": jnp.ones((1, dim), jnp.float32),
            "pre_b": jnp.zeros((1, dim), jnp.float32),
            "wq": nrm((dim, dim)), "bq": nrm((1, dim)),
            "wk": nrm((dim, dim)), "bk": nrm((1, dim)),
            "wv": nrm((dim, dim)), "bv": nrm((1, dim)),
            "wp": nrm((dim, dim)), "bp": nrm((1, dim)),
            "n1_g": jnp.ones((1, dim), jnp.float32),
            "n1_b": jnp.zeros((1, dim), jnp.float32),
            "w1": nrm((dim, ff)), "b1": nrm((1, ff)),
            "w2": nrm((ff, dim)), "b2": nrm((1, dim)),
        })
    return params


if __name__ == "__main__":
    # embedding_dim=32, num_layers=2, num_heads=4, num_classes=10, seq_len=8, batch=2
    B, N, C = 2, 8, 32
    NUM_LAYERS, NUM_HEADS, NUM_CLASSES = 2, 4, 10

    root = jax.random.PRNGKey(0)
    k_x, k_p = jax.random.split(root)
    x = jax.random.normal(k_x, (B, N, C), dtype=jnp.float32)
    params = init_params(k_p, dim=C, num_layers=NUM_LAYERS,
                         num_classes=NUM_CLASSES, seq_len=N)

    kp = _pack_params(params, NUM_HEADS, NUM_CLASSES)
    fwd = jax.jit(functools.partial(transformer_classifier,
                                    num_heads=NUM_HEADS, num_classes=NUM_CLASSES))
    logits = fwd(x, kp)
    jax.block_until_ready(logits)

    assert logits.shape == (B, NUM_CLASSES) and logits.dtype == jnp.float32
    assert bool(jnp.all(jnp.isfinite(logits)))

    # verify against a pure-JAX implementation of the PyTorch forward
    ref = reference_forward(x, params, num_heads=NUM_HEADS)
    rel_err = float(jnp.max(jnp.abs(logits - ref)) / (jnp.max(jnp.abs(ref)) + 1e-6))
    assert rel_err < 5e-2, f"kernel/reference mismatch: rel err {rel_err}"

    print("KERNEL_OK")
</pallas_src>

<mosaic_0001>
module attributes {stable_mosaic.version = 11 : i64} {
  func.func @_fused_kernel(%arg0: i32, %arg1: memref<16x32xf32, #tpu.memory_space<vmem>>, %arg2: memref<8x32xf32, #tpu.memory_space<vmem>>, %arg3: memref<64x64xf32, #tpu.memory_space<vmem>>, %arg4: memref<64x64xf32, #tpu.memory_space<vmem>>, %arg5: memref<1x1x32xf32, #tpu.memory_space<vmem>>, %arg6: memref<1x1x32xf32, #tpu.memory_space<vmem>>, %arg7: memref<1x12x32x8xf32, #tpu.memory_space<vmem>>, %arg8: memref<1x12x1x8xf32, #tpu.memory_space<vmem>>, %arg9: memref<1x4x8x32xf32, #tpu.memory_space<vmem>>, %arg10: memref<1x1x32xf32, #tpu.memory_space<vmem>>, %arg11: memref<1x1x32xf32, #tpu.memory_space<vmem>>, %arg12: memref<1x1x32xf32, #tpu.memory_space<vmem>>, %arg13: memref<1x32x96xf32, #tpu.memory_space<vmem>>, %arg14: memref<1x1x96xf32, #tpu.memory_space<vmem>>, %arg15: memref<1x96x32xf32, #tpu.memory_space<vmem>>, %arg16: memref<1x1x32xf32, #tpu.memory_space<vmem>>, %arg17: memref<1x32xf32, #tpu.memory_space<vmem>>, %arg18: memref<1x32xf32, #tpu.memory_space<vmem>>, %arg19: memref<1x32xf32, #tpu.memory_space<vmem>>, %arg20: memref<1x1xf32, #tpu.memory_space<vmem>>, %arg21: memref<32x128xf32, #tpu.memory_space<vmem>>, %arg22: memref<1x128xf32, #tpu.memory_space<vmem>>, %arg23: memref<2x128xf32, #tpu.memory_space<vmem>>, %arg24: memref<16x32xf32, #tpu.memory_space<vmem>>) attributes {dimension_semantics = [#tpu.dimension_semantics<arbitrary>], iteration_bounds = array<i64: 2>, scalar_prefetch = 0 : i64, scratch_operands = 1 : i64, tpu.core_type = #tpu.core_type<tc>, window_params = [{pipeline_mode = #tpu.pipeline_mode<synchronous>, transform_indices = @transform_0, window_bounds = array<i64: 16, 32>}, {pipeline_mode = #tpu.pipeline_mode<synchronous>, transform_indices = @transform_1, window_bounds = array<i64: 8, 32>}, {pipeline_mode = #tpu.pipeline_mode<synchronous>, transform_indices = @transform_2, window_bounds = array<i64: 64, 64>}, {pipeline_mode = #tpu.pipeline_mode<synchronous>, transform_indices = @transform_3, window_bounds = array<i64: 64, 64>}, {transform_indices = @transform_4, window_bounds = array<i64: 1, 1, 32>}, {transform_indices = @transform_5, window_bounds = array<i64: 1, 1, 32>}, {transform_indices = @transform_6, window_bounds = array<i64: 1, 12, 32, 8>}, {transform_indices = @transform_7, window_bounds = array<i64: 1, 12, 1, 8>}, {transform_indices = @transform_8, window_bounds = array<i64: 1, 4, 8, 32>}, {transform_indices = @transform_9, window_bounds = array<i64: 1, 1, 32>}, {transform_indices = @transform_10, window_bounds = array<i64: 1, 1, 32>}, {transform_indices = @transform_11, window_bounds = array<i64: 1, 1, 32>}, {transform_indices = @transform_12, window_bounds = array<i64: 1, 32, 96>}, {transform_indices = @transform_13, window_bounds = array<i64: 1, 1, 96>}, {transform_indices = @transform_14, window_bounds = array<i64: 1, 96, 32>}, {transform_indices = @transform_15, window_bounds = array<i64: 1, 1, 32>}, {pipeline_mode = #tpu.pipeline_mode<synchronous>, transform_indices = @transform_16, window_bounds = array<i64: 1, 32>}, {pipeline_mode = #tpu.pipeline_mode<synchronous>, transform_indices = @transform_17, window_bounds = array<i64: 1, 32>}, {pipeline_mode = #tpu.pipeline_mode<synchronous>, transform_indices = @transform_18, window_bounds = array<i64: 1, 32>}, {pipeline_mode = #tpu.pipeline_mode<synchronous>, transform_indices = @transform_19, window_bounds = array<i64: 1, 1>}, {pipeline_mode = #tpu.pipeline_mode<synchronous>, transform_indices = @transform_20, window_bounds = array<i64: 32, 128>}, {pipeline_mode = #tpu.pipeline_mode<synchronous>, transform_indices = @transform_21, window_bounds = array<i64: 1, 128>}, {pipeline_mode = #tpu.pipeline_mode<synchronous>, transform_indices = @transform_22, window_bounds = array<i64: 2, 128>}]} {
    %c0_i32 = arith.constant 0 : i32
    %0 = arith.cmpi eq, %arg0, %c0_i32 : i32
    %1 = arith.extui %0 : i1 to i32
    %c0_i32_0 = arith.constant 0 : i32
    %2 = arith.cmpi ne, %1, %c0_i32_0 : i32
    scf.if %2 {
      %c0_172 = arith.constant 0 : index
      %c0_173 = arith.constant 0 : index
      %210 = vector.load %arg1[%c0_172, %c0_173] : memref<16x32xf32, #tpu.memory_space<vmem>>, vector<16x32xf32>
      %c0_174 = arith.constant 0 : index
      %c0_175 = arith.constant 0 : index
      %211 = vector.load %arg2[%c0_174, %c0_175] : memref<8x32xf32, #tpu.memory_space<vmem>>, vector<8x32xf32>
      %212 = tpu.concatenate %211, %211 in 0 : vector<8x32xf32>, vector<8x32xf32> -> vector<16x32xf32>
      %213 = arith.addf %210, %212 : vector<16x32xf32>
      %c0_176 = arith.constant 0 : index
      %c0_177 = arith.constant 0 : index
      %214 = vector.load %arg24[%c0_176, %c0_177] : memref<16x32xf32, #tpu.memory_space<vmem>>, vector<16x32xf32>
      tpu.vector_store %arg24[%c0_176, %c0_177], %213 {strides = array<i32>} : memref<16x32xf32, #tpu.memory_space<vmem>>, vector<16x32xf32>,
    } else {
    }
    %c0 = arith.constant 0 : index
    %c0_1 = arith.constant 0 : index
    %3 = vector.load %arg24[%c0, %c0_1] : memref<16x32xf32, #tpu.memory_space<vmem>>, vector<16x32xf32>
    %c0_2 = arith.constant 0 : index
    %c0_3 = arith.constant 0 : index
    %c0_4 = arith.constant 0 : index
    %4 = vector.load %arg5[%c0_2, %c0_3, %c0_4] : memref<1x1x32xf32, #tpu.memory_space<vmem>>, vector<1x1x32xf32>
    %5 = vector.shape_cast %4 : vector<1x1x32xf32> to vector<1x32xf32>
    %c0_5 = arith.constant 0 : index
    %c0_6 = arith.constant 0 : index
    %c0_7 = arith.constant 0 : index
    %6 = vector.load %arg6[%c0_5, %c0_6, %c0_7] : memref<1x1x32xf32, #tpu.memory_space<vmem>>, vector<1x1x32xf32>
    %7 = vector.shape_cast %6 : vector<1x1x32xf32> to vector<1x32xf32>
    %cst = arith.constant dense<0.000000e+00> : vector<16xf32>
    %8 = vector.multi_reduction <add>, %3, %cst [1] : vector<16x32xf32> to vector<16xf32>
    %9 = vector.shape_cast %8 : vector<16xf32> to vector<16x1xf32>
    %cst_8 = arith.constant 3.200000e+01 : f32
    %10 = vector.broadcast %cst_8 : f32 to vector<16x1xf32>
    %11 = arith.divf %9, %10 : vector<16x1xf32>
    %12 = vector.broadcast %11 : vector<16x1xf32> to vector<16x32xf32>
    %13 = arith.subf %3, %12 : vector<16x32xf32>
    %14 = arith.mulf %13, %13 : vector<16x32xf32>
    %cst_9 = arith.constant dense<0.000000e+00> : vector<16xf32>
    %15 = vector.multi_reduction <add>, %14, %cst_9 [1] : vector<16x32xf32> to vector<16xf32>
    %16 = vector.shape_cast %15 : vector<16xf32> to vector<16x1xf32>
    %cst_10 = arith.constant 3.200000e+01 : f32
    %17 = vector.broadcast %cst_10 : f32 to vector<16x1xf32>
    %18 = arith.divf %16, %17 : vector<16x1xf32>
    %19 = vector.broadcast %11 : vector<16x1xf32> to vector<16x32xf32>
    %20 = arith.subf %3, %19 : vector<16x32xf32>
    %cst_11 = arith.constant 9.99999974E-6 : f32
    %21 = vector.broadcast %cst_11 : f32 to vector<16x1xf32>
    %22 = arith.addf %18, %21 : vector<16x1xf32>
    %23 = math.rsqrt %22 : vector<16x1xf32>
    %24 = vector.broadcast %23 : vector<16x1xf32> to vector<16x32xf32>
    %25 = arith.mulf %20, %24 : vector<16x32xf32>
    %26 = vector.broadcast %5 : vector<1x32xf32> to vector<16x32xf32>
    %27 = arith.mulf %25, %26 : vector<16x32xf32>
    %28 = vector.broadcast %7 : vector<1x32xf32> to vector<16x32xf32>
    %29 = arith.addf %27, %28 : vector<16x32xf32>
    %c0_12 = arith.constant 0 : index
    %c0_13 = arith.constant 0 : index
    %c0_14 = arith.constant 0 : index
    %c0_15 = arith.constant 0 : index
    %30 = vector.load %arg7[%c0_12, %c0_13, %c0_14, %c0_15] : memref<1x12x32x8xf32, #tpu.memory_space<vmem>>, vector<1x1x32x8xf32>
    %31 = vector.shape_cast %30 : vector<1x1x32x8xf32> to vector<32x8xf32>
    %cst_16 = arith.constant dense<0.000000e+00> : vector<16x8xf32>
    %32 = tpu.matmul %29, %31, %cst_16 {dimension_numbers = #tpu.dot_dimension_numbers<[1], [0], [0], [1], [0, 0, 1, 1], [], []>} : vector<16x32xf32>, vector<32x8xf32>, vector<16x8xf32> -> vector<16x8xf32>
    %c0_17 = arith.constant 0 : index
    %c0_18 = arith.constant 0 : index
    %c0_19 = arith.constant 0 : index
    %c0_20 = arith.constant 0 : index
    %33 = vector.load %arg8[%c0_17, %c0_18, %c0_19, %c0_20] : memref<1x12x1x8xf32, #tpu.memory_space<vmem>>, vector<1x1x1x8xf32>
    %34 = vector.shape_cast %33 : vector<1x1x1x8xf32> to vector<1x8xf32>
    %35 = vector.broadcast %34 : vector<1x8xf32> to vector<16x8xf32>
    %36 = arith.addf %32, %35 : vector<16x8xf32>
    %c0_21 = arith.constant 0 : index
    %c1 = arith.constant 1 : index
    %c0_22 = arith.constant 0 : index
    %c0_23 = arith.constant 0 : index
    %37 = vector.load %arg7[%c0_21, %c1, %c0_22, %c0_23] : memref<1x12x32x8xf32, #tpu.memory_space<vmem>>, vector<1x1x32x8xf32>
    %38 = vector.shape_cast %37 : vector<1x1x32x8xf32> to vector<32x8xf32>
    %cst_24 = arith.constant dense<0.000000e+00> : vector<16x8xf32>
    %39 = tpu.matmul %29, %38, %cst_24 {dimension_numbers = #tpu.dot_dimension_numbers<[1], [0], [0], [1], [0, 0, 1, 1], [], []>} : vector<16x32xf32>, vector<32x8xf32>, vector<16x8xf32> -> vector<16x8xf32>
    %c0_25 = arith.constant 0 : index
    %c1_26 = arith.constant 1 : index
    %c0_27 = arith.constant 0 : index
    %c0_28 = arith.constant 0 : index
    %40 = vector.load %arg8[%c0_25, %c1_26, %c0_27, %c0_28] : memref<1x12x1x8xf32, #tpu.memory_space<vmem>>, vector<1x1x1x8xf32>
    %41 = vector.shape_cast %40 : vector<1x1x1x8xf32> to vector<1x8xf32>
    %42 = vector.broadcast %41 : vector<1x8xf32> to vector<16x8xf32>
    %43 = arith.addf %39, %42 : vector<16x8xf32>
    %c0_29 = arith.constant 0 : index
    %c2 = arith.constant 2 : index
    %c0_30 = arith.constant 0 : index
    %c0_31 = arith.constant 0 : index
    %44 = vector.load %arg7[%c0_29, %c2, %c0_30, %c0_31] : memref<1x12x32x8xf32, #tpu.memory_space<vmem>>, vector<1x1x32x8xf32>
    %45 = vector.shape_cast %44 : vector<1x1x32x8xf32> to vector<32x8xf32>
    %cst_32 = arith.constant dense<0.000000e+00> : vector<16x8xf32>
    %46 = tpu.matmul %29, %45, %cst_32 {dimension_numbers = #tpu.dot_dimension_numbers<[1], [0], [0], [1], [0, 0, 1, 1], [], []>} : vector<16x32xf32>, vector<32x8xf32>, vector<16x8xf32> -> vector<16x8xf32>
    %c0_33 = arith.constant 0 : index
    %c2_34 = arith.constant 2 : index
    %c0_35 = arith.constant 0 : index
    %c0_36 = arith.constant 0 : index
    %47 = vector.load %arg8[%c0_33, %c2_34, %c0_35, %c0_36] : memref<1x12x1x8xf32, #tpu.memory_space<vmem>>, vector<1x1x1x8xf32>
    %48 = vector.shape_cast %47 : vector<1x1x1x8xf32> to vector<1x8xf32>
    %49 = vector.broadcast %48 : vector<1x8xf32> to vector<16x8xf32>
    %50 = arith.addf %46, %49 : vector<16x8xf32>
    %c0_37 = arith.constant 0 : index
    %c3 = arith.constant 3 : index
    %c0_38 = arith.constant 0 : index
    %c0_39 = arith.constant 0 : index
    %51 = vector.load %arg7[%c0_37, %c3, %c0_38, %c0_39] : memref<1x12x32x8xf32, #tpu.memory_space<vmem>>, vector<1x1x32x8xf32>
    %52 = vector.shape_cast %51 : vector<1x1x32x8xf32> to vector<32x8xf32>
    %cst_40 = arith.constant dense<0.000000e+00> : vector<16x8xf32>
    %53 = tpu.matmul %29, %52, %cst_40 {dimension_numbers = #tpu.dot_dimension_numbers<[1], [0], [0], [1], [0, 0, 1, 1], [], []>} : vector<16x32xf32>, vector<32x8xf32>, vector<16x8xf32> -> vector<16x8xf32>
    %c0_41 = arith.constant 0 : index
    %c3_42 = arith.constant 3 : index
    %c0_43 = arith.constant 0 : index
    %c0_44 = arith.constant 0 : index
    %54 = vector.load %arg8[%c0_41, %c3_42, %c0_43, %c0_44] : memref<1x12x1x8xf32, #tpu.memory_space<vmem>>, vector<1x1x1x8xf32>
    %55 = vector.shape_cast %54 : vector<1x1x1x8xf32> to vector<1x8xf32>
    %56 = vector.broadcast %55 : vector<1x8xf32> to vector<16x8xf32>
    %57 = arith.addf %53, %56 : vector<16x8xf32>
    %58 = tpu.concatenate %36, %43, %50, %57 in 0 : vector<16x8xf32>, vector<16x8xf32>, vector<16x8xf32>, vector<16x8xf32> -> vector<64x8xf32>
    %c0_45 = arith.constant 0 : index
    %c4 = arith.constant 4 : index
    %c0_46 = arith.constant 0 : index
    %c0_47 = arith.constant 0 : index
    %59 = vector.load %arg7[%c0_45, %c4, %c0_46, %c0_47] : memref<1x12x32x8xf32, #tpu.memory_space<vmem>>, vector<1x1x32x8xf32>
    %60 = vector.shape_cast %59 : vector<1x1x32x8xf32> to vector<32x8xf32>
    %cst_48 = arith.constant dense<0.000000e+00> : vector<16x8xf32>
    %61 = tpu.matmul %29, %60, %cst_48 {dimension_numbers = #tpu.dot_dimension_numbers<[1], [0], [0], [1], [0, 0, 1, 1], [], []>} : vector<16x32xf32>, vector<32x8xf32>, vector<16x8xf32> -> vector<16x8xf32>
    %c0_49 = arith.constant 0 : index
    %c4_50 = arith.constant 4 : index
    %c0_51 = arith.constant 0 : index
    %c0_52 = arith.constant 0 : index
    %62 = vector.load %arg8[%c0_49, %c4_50, %c0_51, %c0_52] : memref<1x12x1x8xf32, #tpu.memory_space<vmem>>, vector<1x1x1x8xf32>
    %63 = vector.shape_cast %62 : vector<1x1x1x8xf32> to vector<1x8xf32>
    %64 = vector.broadcast %63 : vector<1x8xf32> to vector<16x8xf32>
    %65 = arith.addf %61, %64 : vector<16x8xf32>
    %c0_53 = arith.constant 0 : index
    %c5 = arith.constant 5 : index
    %c0_54 = arith.constant 0 : index
    %c0_55 = arith.constant 0 : index
    %66 = vector.load %arg7[%c0_53, %c5, %c0_54, %c0_55] : memref<1x12x32x8xf32, #tpu.memory_space<vmem>>, vector<1x1x32x8xf32>
    %67 = vector.shape_cast %66 : vector<1x1x32x8xf32> to vector<32x8xf32>
    %cst_56 = arith.constant dense<0.000000e+00> : vector<16x8xf32>
    %68 = tpu.matmul %29, %67, %cst_56 {dimension_numbers = #tpu.dot_dimension_numbers<[1], [0], [0], [1], [0, 0, 1, 1], [], []>} : vector<16x32xf32>, vector<32x8xf32>, vector<16x8xf32> -> vector<16x8xf32>
    %c0_57 = arith.constant 0 : index
    %c5_58 = arith.constant 5 : index
    %c0_59 = arith.constant 0 : index
    %c0_60 = arith.constant 0 : index
    %69 = vector.load %arg8[%c0_57, %c5_58, %c0_59, %c0_60] : memref<1x12x1x8xf32, #tpu.memory_space<vmem>>, vector<1x1x1x8xf32>
    %70 = vector.shape_cast %69 : vector<1x1x1x8xf32> to vector<1x8xf32>
    %71 = vector.broadcast %70 : vector<1x8xf32> to vector<16x8xf32>
    %72 = arith.addf %68, %71 : vector<16x8xf32>
    %c0_61 = arith.constant 0 : index
    %c6 = arith.constant 6 : index
    %c0_62 = arith.constant 0 : index
    %c0_63 = arith.constant 0 : index
    %73 = vector.load %arg7[%c0_61, %c6, %c0_62, %c0_63] : memref<1x12x32x8xf32, #tpu.memory_space<vmem>>, vector<1x1x32x8xf32>
    %74 = vector.shape_cast %73 : vector<1x1x32x8xf32> to vector<32x8xf32>
    %cst_64 = arith.constant dense<0.000000e+00> : vector<16x8xf32>
    %75 = tpu.matmul %29, %74, %cst_64 {dimension_numbers = #tpu.dot_dimension_numbers<[1], [0], [0], [1], [0, 0, 1, 1], [], []>} : vector<16x32xf32>, vector<32x8xf32>, vector<16x8xf32> -> vector<16x8xf32>
    %c0_65 = arith.constant 0 : index
    %c6_66 = arith.constant 6 : index
    %c0_67 = arith.constant 0 : index
    %c0_68 = arith.constant 0 : index
    %76 = vector.load %arg8[%c0_65, %c6_66, %c0_67, %c0_68] : memref<1x12x1x8xf32, #tpu.memory_space<vmem>>, vector<1x1x1x8xf32>
    %77 = vector.shape_cast %76 : vector<1x1x1x8xf32> to vector<1x8xf32>
    %78 = vector.broadcast %77 : vector<1x8xf32> to vector<16x8xf32>
    %79 = arith.addf %75, %78 : vector<16x8xf32>
    %c0_69 = arith.constant 0 : index
    %c7 = arith.constant 7 : index
    %c0_70 = arith.constant 0 : index
    %c0_71 = arith.constant 0 : index
    %80 = vector.load %arg7[%c0_69, %c7, %c0_70, %c0_71] : memref<1x12x32x8xf32, #tpu.memory_space<vmem>>, vector<1x1x32x8xf32>
    %81 = vector.shape_cast %80 : vector<1x1x32x8xf32> to vector<32x8xf32>
    %cst_72 = arith.constant dense<0.000000e+00> : vector<16x8xf32>
    %82 = tpu.matmul %29, %81, %cst_72 {dimension_numbers = #tpu.dot_dimension_numbers<[1], [0], [0], [1], [0, 0, 1, 1], [], []>} : vector<16x32xf32>, vector<32x8xf32>, vector<16x8xf32> -> vector<16x8xf32>
    %c0_73 = arith.constant 0 : index
    %c7_74 = arith.constant 7 : index
    %c0_75 = arith.constant 0 : index
    %c0_76 = arith.constant 0 : index
    %83 = vector.load %arg8[%c0_73, %c7_74, %c0_75, %c0_76] : memref<1x12x1x8xf32, #tpu.memory_space<vmem>>, vector<1x1x1x8xf32>
    %84 = vector.shape_cast %83 : vector<1x1x1x8xf32> to vector<1x8xf32>
    %85 = vector.broadcast %84 : vector<1x8xf32> to vector<16x8xf32>
    %86 = arith.addf %82, %85 : vector<16x8xf32>
    %87 = tpu.concatenate %65, %72, %79, %86 in 0 : vector<16x8xf32>, vector<16x8xf32>, vector<16x8xf32>, vector<16x8xf32> -> vector<64x8xf32>
    %c0_77 = arith.constant 0 : index
    %c8 = arith.constant 8 : index
    %c0_78 = arith.constant 0 : index
    %c0_79 = arith.constant 0 : index
    %88 = vector.load %arg7[%c0_77, %c8, %c0_78, %c0_79] : memref<1x12x32x8xf32, #tpu.memory_space<vmem>>, vector<1x1x32x8xf32>
    %89 = vector.shape_cast %88 : vector<1x1x32x8xf32> to vector<32x8xf32>
    %cst_80 = arith.constant dense<0.000000e+00> : vector<16x8xf32>
    %90 = tpu.matmul %29, %89, %cst_80 {dimension_numbers = #tpu.dot_dimension_numbers<[1], [0], [0], [1], [0, 0, 1, 1], [], []>} : vector<16x32xf32>, vector<32x8xf32>, vector<16x8xf32> -> vector<16x8xf32>
    %c0_81 = arith.constant 0 : index
    %c8_82 = arith.constant 8 : index
    %c0_83 = arith.constant 0 : index
    %c0_84 = arith.constant 0 : index
    %91 = vector.load %arg8[%c0_81, %c8_82, %c0_83, %c0_84] : memref<1x12x1x8xf32, #tpu.memory_space<vmem>>, vector<1x1x1x8xf32>
    %92 = vector.shape_cast %91 : vector<1x1x1x8xf32> to vector<1x8xf32>
    %93 = vector.broadcast %92 : vector<1x8xf32> to vector<16x8xf32>
    %94 = arith.addf %90, %93 : vector<16x8xf32>
    %c0_85 = arith.constant 0 : index
    %c9 = arith.constant 9 : index
    %c0_86 = arith.constant 0 : index
    %c0_87 = arith.constant 0 : index
    %95 = vector.load %arg7[%c0_85, %c9, %c0_86, %c0_87] : memref<1x12x32x8xf32, #tpu.memory_space<vmem>>, vector<1x1x32x8xf32>
    %96 = vector.shape_cast %95 : vector<1x1x32x8xf32> to vector<32x8xf32>
    %cst_88 = arith.constant dense<0.000000e+00> : vector<16x8xf32>
    %97 = tpu.matmul %29, %96, %cst_88 {dimension_numbers = #tpu.dot_dimension_numbers<[1], [0], [0], [1], [0, 0, 1, 1], [], []>} : vector<16x32xf32>, vector<32x8xf32>, vector<16x8xf32> -> vector<16x8xf32>
    %c0_89 = arith.constant 0 : index
    %c9_90 = arith.constant 9 : index
    %c0_91 = arith.constant 0 : index
    %c0_92 = arith.constant 0 : index
    %98 = vector.load %arg8[%c0_89, %c9_90, %c0_91, %c0_92] : memref<1x12x1x8xf32, #tpu.memory_space<vmem>>, vector<1x1x1x8xf32>
    %99 = vector.shape_cast %98 : vector<1x1x1x8xf32> to vector<1x8xf32>
    %100 = vector.broadcast %99 : vector<1x8xf32> to vector<16x8xf32>
    %101 = arith.addf %97, %100 : vector<16x8xf32>
    %c0_93 = arith.constant 0 : index
    %c10 = arith.constant 10 : index
    %c0_94 = arith.constant 0 : index
    %c0_95 = arith.constant 0 : index
    %102 = vector.load %arg7[%c0_93, %c10, %c0_94, %c0_95] : memref<1x12x32x8xf32, #tpu.memory_space<vmem>>, vector<1x1x32x8xf32>
    %103 = vector.shape_cast %102 : vector<1x1x32x8xf32> to vector<32x8xf32>
    %cst_96 = arith.constant dense<0.000000e+00> : vector<16x8xf32>
    %104 = tpu.matmul %29, %103, %cst_96 {dimension_numbers = #tpu.dot_dimension_numbers<[1], [0], [0], [1], [0, 0, 1, 1], [], []>} : vector<16x32xf32>, vector<32x8xf32>, vector<16x8xf32> -> vector<16x8xf32>
    %c0_97 = arith.constant 0 : index
    %c10_98 = arith.constant 10 : index
    %c0_99 = arith.constant 0 : index
    %c0_100 = arith.constant 0 : index
    %105 = vector.load %arg8[%c0_97, %c10_98, %c0_99, %c0_100] : memref<1x12x1x8xf32, #tpu.memory_space<vmem>>, vector<1x1x1x8xf32>
    %106 = vector.shape_cast %105 : vector<1x1x1x8xf32> to vector<1x8xf32>
    %107 = vector.broadcast %106 : vector<1x8xf32> to vector<16x8xf32>
    %108 = arith.addf %104, %107 : vector<16x8xf32>
    %c0_101 = arith.constant 0 : index
    %c11 = arith.constant 11 : index
    %c0_102 = arith.constant 0 : index
    %c0_103 = arith.constant 0 : index
    %109 = vector.load %arg7[%c0_101, %c11, %c0_102, %c0_103] : memref<1x12x32x8xf32, #tpu.memory_space<vmem>>, vector<1x1x32x8xf32>
    %110 = vector.shape_cast %109 : vector<1x1x32x8xf32> to vector<32x8xf32>
    %cst_104 = arith.constant dense<0.000000e+00> : vector<16x8xf32>
    %111 = tpu.matmul %29, %110, %cst_104 {dimension_numbers = #tpu.dot_dimension_numbers<[1], [0], [0], [1], [0, 0, 1, 1], [], []>} : vector<16x32xf32>, vector<32x8xf32>, vector<16x8xf32> -> vector<16x8xf32>
    %c0_105 = arith.constant 0 : index
    %c11_106 = arith.constant 11 : index
    %c0_107 = arith.constant 0 : index
    %c0_108 = arith.constant 0 : index
    %112 = vector.load %arg8[%c0_105, %c11_106, %c0_107, %c0_108] : memref<1x12x1x8xf32, #tpu.memory_space<vmem>>, vector<1x1x1x8xf32>
    %113 = vector.shape_cast %112 : vector<1x1x1x8xf32> to vector<1x8xf32>
    %114 = vector.broadcast %113 : vector<1x8xf32> to vector<16x8xf32>
    %115 = arith.addf %111, %114 : vector<16x8xf32>
    %116 = tpu.concatenate %94, %101, %108, %115 in 0 : vector<16x8xf32>, vector<16x8xf32>, vector<16x8xf32>, vector<16x8xf32> -> vector<64x8xf32>
    %cst_109 = arith.constant dense<0.000000e+00> : vector<64x64xf32>
    %117 = tpu.matmul %58, %87, %cst_109 {dimension_numbers = #tpu.dot_dimension_numbers<[1], [1], [0], [0], [0, 0, 1, 0], [], []>} : vector<64x8xf32>, vector<64x8xf32>, vector<64x64xf32> -> vector<64x64xf32>
    %c0_110 = arith.constant 0 : index
    %c0_111 = arith.constant 0 : index
    %118 = vector.load %arg3[%c0_110, %c0_111] : memref<64x64xf32, #tpu.memory_space<vmem>>, vector<64x64xf32>
    %119 = arith.addf %117, %118 : vector<64x64xf32>
    %cst_112 = arith.constant dense<0xFF800000> : vector<64xf32>
    %120 = vector.multi_reduction <maximumf>, %119, %cst_112 [1] : vector<64x64xf32> to vector<64xf32>
    %121 = vector.shape_cast %120 : vector<64xf32> to vector<64x1xf32>
    %122 = vector.broadcast %121 : vector<64x1xf32> to vector<64x64xf32>
    %123 = arith.subf %119, %122 : vector<64x64xf32>
    %124 = math.exp %123 : vector<64x64xf32>
    %cst_113 = arith.constant dense<0.000000e+00> : vector<64xf32>
    %125 = vector.multi_reduction <add>, %124, %cst_113 [1] : vector<64x64xf32> to vector<64xf32>
    %126 = vector.shape_cast %125 : vector<64xf32> to vector<64x1xf32>
    %127 = tpu.reciprocal %126 {approx = true} : vector<64x1xf32> -> vector<64x1xf32>
    %128 = vector.broadcast %127 : vector<64x1xf32> to vector<64x64xf32>
    %129 = arith.mulf %124, %128 : vector<64x64xf32>
    %cst_114 = arith.constant dense<0.000000e+00> : vector<64x8xf32>
    %130 = tpu.matmul %129, %116, %cst_114 {dimension_numbers = #tpu.dot_dimension_numbers<[1], [0], [0], [1], [0, 0, 1, 1], [], []>} : vector<64x64xf32>, vector<64x8xf32>, vector<64x8xf32> -> vector<64x8xf32>
    %c0_115 = arith.constant 0 : index
    %c0_116 = arith.constant 0 : index
    %131 = vector.load %arg4[%c0_115, %c0_116] : memref<64x64xf32, #tpu.memory_space<vmem>>, vector<64x64xf32>
    %cst_117 = arith.constant dense<0.000000e+00> : vector<64x8xf32>
    %132 = tpu.matmul %131, %130, %cst_117 {dimension_numbers = #tpu.dot_dimension_numbers<[1], [0], [0], [1], [0, 0, 1, 1], [], []>} : vector<64x64xf32>, vector<64x8xf32>, vector<64x8xf32> -> vector<64x8xf32>
    %c0_118 = arith.constant 0 : index
    %c0_119 = arith.constant 0 : index
    %c0_120 = arith.constant 0 : index
    %133 = vector.load %arg10[%c0_118, %c0_119, %c0_120] : memref<1x1x32xf32, #tpu.memory_space<vmem>>, vector<1x1x32xf32>
    %134 = vector.shape_cast %133 : vector<1x1x32xf32> to vector<1x32xf32>
    %135 = vector.extract_strided_slice %132 {offsets = [0, 0], sizes = [16, 8], strides = [1, 1]} : vector<64x8xf32> to vector<16x8xf32>
    %c0_121 = arith.constant 0 : index
    %c0_122 = arith.constant 0 : index
    %c0_123 = arith.constant 0 : index
    %c0_124 = arith.constant 0 : index
    %136 = vector.load %arg9[%c0_121, %c0_122, %c0_123, %c0_124] : memref<1x4x8x32xf32, #tpu.memory_space<vmem>>, vector<1x1x8x32xf32>
    %137 = vector.shape_cast %136 : vector<1x1x8x32xf32> to vector<8x32xf32>
    %cst_125 = arith.constant dense<0.000000e+00> : vector<16x32xf32>
    %138 = tpu.matmul %135, %137, %cst_125 {dimension_numbers = #tpu.dot_dimension_numbers<[1], [0], [0], [1], [0, 0, 1, 1], [], []>} : vector<16x8xf32>, vector<8x32xf32>, vector<16x32xf32> -> vector<16x32xf32>
    %139 = vector.broadcast %134 : vector<1x32xf32> to vector<16x32xf32>
    %140 = arith.addf %139, %138 : vector<16x32xf32>
    %141 = vector.extract_strided_slice %132 {offsets = [16, 0], sizes = [16, 8], strides = [1, 1]} : vector<64x8xf32> to vector<16x8xf32>
    %c0_126 = arith.constant 0 : index
    %c1_127 = arith.constant 1 : index
    %c0_128 = arith.constant 0 : index
    %c0_129 = arith.constant 0 : index
    %142 = vector.load %arg9[%c0_126, %c1_127, %c0_128, %c0_129] : memref<1x4x8x32xf32, #tpu.memory_space<vmem>>, vector<1x1x8x32xf32>
    %143 = vector.shape_cast %142 : vector<1x1x8x32xf32> to vector<8x32xf32>
    %cst_130 = arith.constant dense<0.000000e+00> : vector<16x32xf32>
    %144 = tpu.matmul %141, %143, %cst_130 {dimension_numbers = #tpu.dot_dimension_numbers<[1], [0], [0], [1], [0, 0, 1, 1], [], []>} : vector<16x8xf32>, vector<8x32xf32>, vector<16x32xf32> -> vector<16x32xf32>
    %145 = arith.addf %140, %144 : vector<16x32xf32>
    %146 = vector.extract_strided_slice %132 {offsets = [32, 0], sizes = [16, 8], strides = [1, 1]} : vector<64x8xf32> to vector<16x8xf32>
    %c0_131 = arith.constant 0 : index
    %c2_132 = arith.constant 2 : index
    %c0_133 = arith.constant 0 : index
    %c0_134 = arith.constant 0 : index
    %147 = vector.load %arg9[%c0_131, %c2_132, %c0_133, %c0_134] : memref<1x4x8x32xf32, #tpu.memory_space<vmem>>, vector<1x1x8x32xf32>
    %148 = vector.shape_cast %147 : vector<1x1x8x32xf32> to vector<8x32xf32>
    %cst_135 = arith.constant dense<0.000000e+00> : vector<16x32xf32>
    %149 = tpu.matmul %146, %148, %cst_135 {dimension_numbers = #tpu.dot_dimension_numbers<[1], [0], [0], [1], [0, 0, 1, 1], [], []>} : vector<16x8xf32>, vector<8x32xf32>, vector<16x32xf32> -> vector<16x32xf32>
    %150 = arith.addf %145, %149 : vector<16x32xf32>
    %151 = vector.extract_strided_slice %132 {offsets = [48, 0], sizes = [16, 8], strides = [1, 1]} : vector<64x8xf32> to vector<16x8xf32>
    %c0_136 = arith.constant 0 : index
    %c3_137 = arith.constant 3 : index
    %c0_138 = arith.constant 0 : index
    %c0_139 = arith.constant 0 : index
    %152 = vector.load %arg9[%c0_136, %c3_137, %c0_138, %c0_139] : memref<1x4x8x32xf32, #tpu.memory_space<vmem>>, vector<1x1x8x32xf32>
    %153 = vector.shape_cast %152 : vector<1x1x8x32xf32> to vector<8x32xf32>
    %cst_140 = arith.constant dense<0.000000e+00> : vector<16x32xf32>
    %154 = tpu.matmul %151, %153, %cst_140 {dimension_numbers = #tpu.dot_dimension_numbers<[1], [0], [0], [1], [0, 0, 1, 1], [], []>} : vector<16x8xf32>, vector<8x32xf32>, vector<16x32xf32> -> vector<16x32xf32>
    %155 = arith.addf %150, %154 : vector<16x32xf32>
    %156 = arith.addf %3, %155 : vector<16x32xf32>
    %c0_141 = arith.constant 0 : index
    %c0_142 = arith.constant 0 : index
    %c0_143 = arith.constant 0 : index
    %157 = vector.load %arg11[%c0_141, %c0_142, %c0_143] : memref<1x1x32xf32, #tpu.memory_space<vmem>>, vector<1x1x32xf32>
    %158 = vector.shape_cast %157 : vector<1x1x32xf32> to vector<1x32xf32>
    %c0_144 = arith.constant 0 : index
    %c0_145 = arith.constant 0 : index
    %c0_146 = arith.constant 0 : index
    %159 = vector.load %arg12[%c0_144, %c0_145, %c0_146] : memref<1x1x32xf32, #tpu.memory_space<vmem>>, vector<1x1x32xf32>
    %160 = vector.shape_cast %159 : vector<1x1x32xf32> to vector<1x32xf32>
    %cst_147 = arith.constant dense<0.000000e+00> : vector<16xf32>
    %161 = vector.multi_reduction <add>, %156, %cst_147 [1] : vector<16x32xf32> to vector<16xf32>
    %162 = vector.shape_cast %161 : vector<16xf32> to vector<16x1xf32>
    %cst_148 = arith.constant 3.200000e+01 : f32
    %163 = vector.broadcast %cst_148 : f32 to vector<16x1xf32>
    %164 = arith.divf %162, %163 : vector<16x1xf32>
    %165 = vector.broadcast %164 : vector<16x1xf32> to vector<16x32xf32>
    %166 = arith.subf %156, %165 : vector<16x32xf32>
    %167 = arith.mulf %166, %166 : vector<16x32xf32>
    %cst_149 = arith.constant dense<0.000000e+00> : vector<16xf32>
    %168 = vector.multi_reduction <add>, %167, %cst_149 [1] : vector<16x32xf32> to vector<16xf32>
    %169 = vector.shape_cast %168 : vector<16xf32> to vector<16x1xf32>
    %cst_150 = arith.constant 3.200000e+01 : f32
    %170 = vector.broadcast %cst_150 : f32 to vector<16x1xf32>
    %171 = arith.divf %169, %170 : vector<16x1xf32>
    %172 = vector.broadcast %164 : vector<16x1xf32> to vector<16x32xf32>
    %173 = arith.subf %156, %172 : vector<16x32xf32>
    %cst_151 = arith.constant 9.99999974E-6 : f32
    %174 = vector.broadcast %cst_151 : f32 to vector<16x1xf32>
    %175 = arith.addf %171, %174 : vector<16x1xf32>
    %176 = math.rsqrt %175 : vector<16x1xf32>
    %177 = vector.broadcast %176 : vector<16x1xf32> to vector<16x32xf32>
    %178 = arith.mulf %173, %177 : vector<16x32xf32>
    %179 = vector.broadcast %158 : vector<1x32xf32> to vector<16x32xf32>
    %180 = arith.mulf %178, %179 : vector<16x32xf32>
    %181 = vector.broadcast %160 : vector<1x32xf32> to vector<16x32xf32>
    %182 = arith.addf %180, %181 : vector<16x32xf32>
    %c0_152 = arith.constant 0 : index
    %c0_153 = arith.constant 0 : index
    %c0_154 = arith.constant 0 : index
    %183 = vector.load %arg13[%c0_152, %c0_153, %c0_154] : memref<1x32x96xf32, #tpu.memory_space<vmem>>, vector<1x32x96xf32>
    %184 = vector.shape_cast %183 : vector<1x32x96xf32> to vector<32x96xf32>
    %cst_155 = arith.constant dense<0.000000e+00> : vector<16x96xf32>
    %185 = tpu.matmul %182, %184, %cst_155 {dimension_numbers = #tpu.dot_dimension_numbers<[1], [0], [0], [1], [0, 0, 1, 1], [], []>} : vector<16x32xf32>, vector<32x96xf32>, vector<16x96xf32> -> vector<16x96xf32>
    %c0_156 = arith.constant 0 : index
    %c0_157 = arith.constant 0 : index
    %c0_158 = arith.constant 0 : index
    %186 = vector.load %arg14[%c0_156, %c0_157, %c0_158] : memref<1x1x96xf32, #tpu.memory_space<vmem>>, vector<1x1x96xf32>
    %187 = vector.shape_cast %186 : vector<1x1x96xf32> to vector<1x96xf32>
    %188 = vector.broadcast %187 : vector<1x96xf32> to vector<16x96xf32>
    %189 = arith.addf %185, %188 : vector<16x96xf32>
    %cst_159 = arith.constant 5.000000e-01 : f32
    %190 = vector.broadcast %cst_159 : f32 to vector<16x96xf32>
    %191 = arith.mulf %190, %189 : vector<16x96xf32>
    %cst_160 = arith.constant 0.707106769 : f32
    %192 = vector.broadcast %cst_160 : f32 to vector<16x96xf32>
    %193 = arith.mulf %189, %192 : vector<16x96xf32>
    %194 = math.erf %193 : vector<16x96xf32>
    %cst_161 = arith.constant 1.000000e+00 : f32
    %195 = vector.broadcast %cst_161 : f32 to vector<16x96xf32>
    %196 = arith.addf %195, %194 : vector<16x96xf32>
    %197 = arith.mulf %191, %196 : vector<16x96xf32>
    %c0_162 = arith.constant 0 : index
    %c0_163 = arith.constant 0 : index
    %c0_164 = arith.constant 0 : index
    %198 = vector.load %arg15[%c0_162, %c0_163, %c0_164] : memref<1x96x32xf32, #tpu.memory_space<vmem>>, vector<1x96x32xf32>
    %199 = vector.shape_cast %198 : vector<1x96x32xf32> to vector<96x32xf32>
    %cst_165 = arith.constant dense<0.000000e+00> : vector<16x32xf32>
    %200 = tpu.matmul %197, %199, %cst_165 {dimension_numbers = #tpu.dot_dimension_numbers<[1], [0], [0], [1], [0, 0, 1, 1], [], []>} : vector<16x96xf32>, vector<96x32xf32>, vector<16x32xf32> -> vector<16x32xf32>
    %c0_166 = arith.constant 0 : index
    %c0_167 = arith.constant 0 : index
    %c0_168 = arith.constant 0 : index
    %201 = vector.load %arg16[%c0_166, %c0_167, %c0_168] : memref<1x1x32xf32, #tpu.memory_space<vmem>>, vector<1x1x32xf32>
    %202 = vector.shape_cast %201 : vector<1x1x32xf32> to vector<1x32xf32>
    %203 = vector.broadcast %202 : vector<1x32xf32> to vector<16x32xf32>
    %204 = arith.addf %200, %203 : vector<16x32xf32>
    %205 = arith.addf %182, %204 : vector<16x32xf32>
    %c0_169 = arith.constant 0 : index
    %c0_170 = arith.constant 0 : index
    %206 = vector.load %arg24[%c0_169, %c0_170] : memref<16x32xf32, #tpu.memory_space<vmem>>, vector<16x32xf32>
    tpu.vector_store %arg24[%c0_169, %c0_170], %205 {strides = array<i32>} : memref<16x32xf32, #tpu.memory_space<vmem>>, vector<16x32xf32>,
    %c1_i32 = arith.constant 1 : i32
    %207 = arith.cmpi eq, %arg0, %c1_i32 : i32
    %208 = arith.extui %207 : i1 to i32
    %c0_i32_171 = arith.constant 0 : i32
    %209 = arith.cmpi ne, %208, %c0_i32_171 : i32
    scf.if %209 {
      %c0_172 = arith.constant 0 : index
      %c0_173 = arith.constant 0 : index
      %210 = vector.load %arg17[%c0_172, %c0_173] : memref<1x32xf32, #tpu.memory_space<vmem>>, vector<1x32xf32>
      %c0_174 = arith.constant 0 : index
      %c0_175 = arith.constant 0 : index
      %211 = vector.load %arg18[%c0_174, %c0_175] : memref<1x32xf32, #tpu.memory_space<vmem>>, vector<1x32xf32>
      %cst_176 = arith.constant dense<0.000000e+00> : vector<16xf32>
      %212 = vector.multi_reduction <add>, %205, %cst_176 [1] : vector<16x32xf32> to vector<16xf32>
      %213 = vector.shape_cast %212 : vector<16xf32> to vector<16x1xf32>
      %cst_177 = arith.constant 3.200000e+01 : f32
      %214 = vector.broadcast %cst_177 : f32 to vector<16x1xf32>
      %215 = arith.divf %213, %214 : vector<16x1xf32>
      %216 = vector.broadcast %215 : vector<16x1xf32> to vector<16x32xf32>
      %217 = arith.subf %205, %216 : vector<16x32xf32>
      %218 = arith.mulf %217, %217 : vector<16x32xf32>
      %cst_178 = arith.constant dense<0.000000e+00> : vector<16xf32>
      %219 = vector.multi_reduction <add>, %218, %cst_178 [1] : vector<16x32xf32> to vector<16xf32>
      %220 = vector.shape_cast %219 : vector<16xf32> to vector<16x1xf32>
      %cst_179 = arith.constant 3.200000e+01 : f32
      %221 = vector.broadcast %cst_179 : f32 to vector<16x1xf32>
      %222 = arith.divf %220, %221 : vector<16x1xf32>
      %223 = vector.broadcast %215 : vector<16x1xf32> to vector<16x32xf32>
      %224 = arith.subf %205, %223 : vector<16x32xf32>
      %cst_180 = arith.constant 9.99999974E-6 : f32
      %225 = vector.broadcast %cst_180 : f32 to vector<16x1xf32>
      %226 = arith.addf %222, %225 : vector<16x1xf32>
      %227 = math.rsqrt %226 : vector<16x1xf32>
      %228 = vector.broadcast %227 : vector<16x1xf32> to vector<16x32xf32>
      %229 = arith.mulf %224, %228 : vector<16x32xf32>
      %230 = vector.broadcast %210 : vector<1x32xf32> to vector<16x32xf32>
      %231 = arith.mulf %229, %230 : vector<16x32xf32>
      %232 = vector.broadcast %211 : vector<1x32xf32> to vector<16x32xf32>
      %233 = arith.addf %231, %232 : vector<16x32xf32>
      %c0_181 = arith.constant 0 : index
      %c0_182 = arith.constant 0 : index
      %234 = vector.load %arg19[%c0_181, %c0_182] : memref<1x32xf32, #tpu.memory_space<vmem>>, vector<1x32xf32>
      %235 = vector.broadcast %234 : vector<1x32xf32> to vector<16x32xf32>
      %236 = arith.mulf %233, %235 : vector<16x32xf32>
      %cst_183 = arith.constant dense<0.000000e+00> : vector<16xf32>
      %237 = vector.multi_reduction <add>, %236, %cst_183 [1] : vector<16x32xf32> to vector<16xf32>
      %238 = vector.shape_cast %237 : vector<16xf32> to vector<16x1xf32>
      %c0_184 = arith.constant 0 : index
      %c0_185 = arith.constant 0 : index
      %239 = vector.load %arg20[%c0_184, %c0_185] : memref<1x1xf32, #tpu.memory_space<vmem>>, vector<1x1xf32>
      %240 = vector.broadcast %239 : vector<1x1xf32> to vector<16x1xf32>
      %241 = arith.addf %238, %240 : vector<16x1xf32>
      %242 = vector.extract_strided_slice %241 {offsets = [0, 0], sizes = [8, 1], strides = [1, 1]} : vector<16x1xf32> to vector<8x1xf32>
      %243 = vector.extract_strided_slice %233 {offsets = [0, 0], sizes = [8, 32], strides = [1, 1]} : vector<16x32xf32> to vector<8x32xf32>
      %cst_186 = arith.constant dense<0xFF800000> : vector<1xf32>
      %244 = vector.multi_reduction <maximumf>, %242, %cst_186 [0] : vector<8x1xf32> to vector<1xf32>
      %245 = vector.shape_cast %244 : vector<1xf32> to vector<1x1xf32>
      %246 = vector.broadcast %245 : vector<1x1xf32> to vector<8x1xf32>
      %247 = arith.subf %242, %246 : vector<8x1xf32>
      %248 = math.exp %247 : vector<8x1xf32>
      %cst_187 = arith.constant dense<0.000000e+00> : vector<1xf32>
      %249 = vector.multi_reduction <add>, %248, %cst_187 [0] : vector<8x1xf32> to vector<1xf32>
      %250 = vector.shape_cast %249 : vector<1xf32> to vector<1x1xf32>
      %251 = tpu.reciprocal %250 {approx = true} : vector<1x1xf32> -> vector<1x1xf32>
      %252 = vector.broadcast %251 : vector<1x1xf32> to vector<8x1xf32>
      %253 = arith.mulf %248, %252 : vector<8x1xf32>
      %254 = vector.broadcast %253 : vector<8x1xf32> to vector<8x32xf32>
      %255 = arith.mulf %254, %243 : vector<8x32xf32>
      %cst_188 = arith.constant dense<0.000000e+00> : vector<32xf32>
      %256 = vector.multi_reduction <add>, %255, %cst_188 [0] : vector<8x32xf32> to vector<32xf32>
      %257 = vector.shape_cast %256 : vector<32xf32> to vector<1x32xf32>
      %258 = vector.extract_strided_slice %241 {offsets = [8, 0], sizes = [8, 1], strides = [1, 1]} : vector<16x1xf32> to vector<8x1xf32>
      %259 = vector.extract_strided_slice %233 {offsets = [8, 0], sizes = [8, 32], strides = [1, 1]} : vector<16x32xf32> to vector<8x32xf32>
      %cst_189 = arith.constant dense<0xFF800000> : vector<1xf32>
      %260 = vector.multi_reduction <maximumf>, %258, %cst_189 [0] : vector<8x1xf32> to vector<1xf32>
      %261 = vector.shape_cast %260 : vector<1xf32> to vector<1x1xf32>
      %262 = vector.broadcast %261 : vector<1x1xf32> to vector<8x1xf32>
      %263 = arith.subf %258, %262 : vector<8x1xf32>
      %264 = math.exp %263 : vector<8x1xf32>
      %cst_190 = arith.constant dense<0.000000e+00> : vector<1xf32>
      %265 = vector.multi_reduction <add>, %264, %cst_190 [0] : vector<8x1xf32> to vector<1xf32>
      %266 = vector.shape_cast %265 : vector<1xf32> to vector<1x1xf32>
      %267 = tpu.reciprocal %266 {approx = true} : vector<1x1xf32> -> vector<1x1xf32>
      %268 = vector.broadcast %267 : vector<1x1xf32> to vector<8x1xf32>
      %269 = arith.mulf %264, %268 : vector<8x1xf32>
      %270 = vector.broadcast %269 : vector<8x1xf32> to vector<8x32xf32>
      %271 = arith.mulf %270, %259 : vector<8x32xf32>
      %cst_191 = arith.constant dense<0.000000e+00> : vector<32xf32>
      %272 = vector.multi_reduction <add>, %271, %cst_191 [0] : vector<8x32xf32> to vector<32xf32>
      %273 = vector.shape_cast %272 : vector<32xf32> to vector<1x32xf32>
      %274 = tpu.concatenate %257, %273 in 0 : vector<1x32xf32>, vector<1x32xf32> -> vector<2x32xf32>
      %c0_192 = arith.constant 0 : index
      %c0_193 = arith.constant 0 : index
      %275 = vector.load %arg21[%c0_192, %c0_193] : memref<32x128xf32, #tpu.memory_space<vmem>>, vector<32x128xf32>
      %cst_194 = arith.constant dense<0.000000e+00> : vector<2x128xf32>
      %276 = tpu.matmul %274, %275, %cst_194 {dimension_numbers = #tpu.dot_dimension_numbers<[1], [0], [0], [1], [0, 0, 1, 1], [], []>} : vector<2x32xf32>, vector<32x128xf32>, vector<2x128xf32> -> vector<2x128xf32>
      %c0_195 = arith.constant 0 : index
      %c0_196 = arith.constant 0 : index
      %277 = vector.load %arg22[%c0_195, %c0_196] : memref<1x128xf32, #tpu.memory_space<vmem>>, vector<1x128xf32>
      %278 = vector.broadcast %277 : vector<1x128xf32> to vector<2x128xf32>
      %279 = arith.addf %276, %278 : vector<2x128xf32>
      %c0_197 = arith.constant 0 : index
      %c0_198 = arith.constant 0 : index
      %280 = vector.load %arg23[%c0_197, %c0_198] : memref<2x128xf32, #tpu.memory_space<vmem>>, vector<2x128xf32>
      tpu.vector_store %arg23[%c0_197, %c0_198], %279 {strides = array<i32>} : memref<2x128xf32, #tpu.memory_space<vmem>>, vector<2x128xf32>,
    } else {
    }
    return
  }
  func.func @transform_0(%arg0: i32) -> (i32, i32) {
    %c0_i32 = arith.constant 0 : i32
    %c0_i32_0 = arith.constant 0 : i32
    %c0_i32_1 = arith.constant 0 : i32
    return %c0_i32, %c0_i32_0 : i32, i32
  }
  func.func @transform_1(%arg0: i32) -> (i32, i32) {
    %c0_i32 = arith.constant 0 : i32
    %c0_i32_0 = arith.constant 0 : i32
    %c0_i32_1 = arith.constant 0 : i32
    return %c0_i32, %c0_i32_0 : i32, i32
  }
  func.func @transform_2(%arg0: i32) -> (i32, i32) {
    %c0_i32 = arith.constant 0 : i32
    %c0_i32_0 = arith.constant 0 : i32
    %c0_i32_1 = arith.constant 0 : i32
    return %c0_i32, %c0_i32_0 : i32, i32
  }
  func.func @transform_3(%arg0: i32) -> (i32, i32) {
    %c0_i32 = arith.constant 0 : i32
    %c0_i32_0 = arith.constant 0 : i32
    %c0_i32_1 = arith.constant 0 : i32
    return %c0_i32, %c0_i32_0 : i32, i32
  }
  func.func @transform_4(%arg0: i32) -> (i32, i32, i32) {
    %c0_i32 = arith.constant 0 : i32
    %c0_i32_0 = arith.constant 0 : i32
    %c0_i32_1 = arith.constant 0 : i32
    return %arg0, %c0_i32, %c0_i32_0 : i32, i32, i32
  }
  func.func @transform_5(%arg0: i32) -> (i32, i32, i32) {
    %c0_i32 = arith.constant 0 : i32
    %c0_i32_0 = arith.constant 0 : i32
    %c0_i32_1 = arith.constant 0 : i32
    return %arg0, %c0_i32, %c0_i32_0 : i32, i32, i32
  }
  func.func @transform_6(%arg0: i32) -> (i32, i32, i32, i32) {
    %c0_i32 = arith.constant 0 : i32
    %c0_i32_0 = arith.constant 0 : i32
    %c0_i32_1 = arith.constant 0 : i32
    %c0_i32_2 = arith.constant 0 : i32
    return %arg0, %c0_i32, %c0_i32_0, %c0_i32_1 : i32, i32, i32, i32
  }
  func.func @transform_7(%arg0: i32) -> (i32, i32, i32, i32) {
    %c0_i32 = arith.constant 0 : i32
    %c0_i32_0 = arith.constant 0 : i32
    %c0_i32_1 = arith.constant 0 : i32
    %c0_i32_2 = arith.constant 0 : i32
    return %arg0, %c0_i32, %c0_i32_0, %c0_i32_1 : i32, i32, i32, i32
  }
  func.func @transform_8(%arg0: i32) -> (i32, i32, i32, i32) {
    %c0_i32 = arith.constant 0 : i32
    %c0_i32_0 = arith.constant 0 : i32
    %c0_i32_1 = arith.constant 0 : i32
    %c0_i32_2 = arith.constant 0 : i32
    return %arg0, %c0_i32, %c0_i32_0, %c0_i32_1 : i32, i32, i32, i32
  }
  func.func @transform_9(%arg0: i32) -> (i32, i32, i32) {
    %c0_i32 = arith.constant 0 : i32
    %c0_i32_0 = arith.constant 0 : i32
    %c0_i32_1 = arith.constant 0 : i32
    return %arg0, %c0_i32, %c0_i32_0 : i32, i32, i32
  }
  func.func @transform_10(%arg0: i32) -> (i32, i32, i32) {
    %c0_i32 = arith.constant 0 : i32
    %c0_i32_0 = arith.constant 0 : i32
    %c0_i32_1 = arith.constant 0 : i32
    return %arg0, %c0_i32, %c0_i32_0 : i32, i32, i32
  }
  func.func @transform_11(%arg0: i32) -> (i32, i32, i32) {
    %c0_i32 = arith.constant 0 : i32
    %c0_i32_0 = arith.constant 0 : i32
    %c0_i32_1 = arith.constant 0 : i32
    return %arg0, %c0_i32, %c0_i32_0 : i32, i32, i32
  }
  func.func @transform_12(%arg0: i32) -> (i32, i32, i32) {
    %c0_i32 = arith.constant 0 : i32
    %c0_i32_0 = arith.constant 0 : i32
    %c0_i32_1 = arith.constant 0 : i32
    return %arg0, %c0_i32, %c0_i32_0 : i32, i32, i32
  }
  func.func @transform_13(%arg0: i32) -> (i32, i32, i32) {
    %c0_i32 = arith.constant 0 : i32
    %c0_i32_0 = arith.constant 0 : i32
    %c0_i32_1 = arith.constant 0 : i32
    return %arg0, %c0_i32, %c0_i32_0 : i32, i32, i32
  }
  func.func @transform_14(%arg0: i32) -> (i32, i32, i32) {
    %c0_i32 = arith.constant 0 : i32
    %c0_i32_0 = arith.constant 0 : i32
    %c0_i32_1 = arith.constant 0 : i32
    return %arg0, %c0_i32, %c0_i32_0 : i32, i32, i32
  }
  func.func @transform_15(%arg0: i32) -> (i32, i32, i32) {
    %c0_i32 = arith.constant 0 : i32
    %c0_i32_0 = arith.constant 0 : i32
    %c0_i32_1 = arith.constant 0 : i32
    return %arg0, %c0_i32, %c0_i32_0 : i32, i32, i32
  }
  func.func @transform_16(%arg0: i32) -> (i32, i32) {
    %c0_i32 = arith.constant 0 : i32
    %c0_i32_0 = arith.constant 0 : i32
    %c0_i32_1 = arith.constant 0 : i32
    return %c0_i32, %c0_i32_0 : i32, i32
  }
  func.func @transform_17(%arg0: i32) -> (i32, i32) {
    %c0_i32 = arith.constant 0 : i32
    %c0_i32_0 = arith.constant 0 : i32
    %c0_i32_1 = arith.constant 0 : i32
    return %c0_i32, %c0_i32_0 : i32, i32
  }
  func.func @transform_18(%arg0: i32) -> (i32, i32) {
    %c0_i32 = arith.constant 0 : i32
    %c0_i32_0 = arith.constant 0 : i32
    %c0_i32_1 = arith.constant 0 : i32
    return %c0_i32, %c0_i32_0 : i32, i32
  }
  func.func @transform_19(%arg0: i32) -> (i32, i32) {
    %c0_i32 = arith.constant 0 : i32
    %c0_i32_0 = arith.constant 0 : i32
    %c0_i32_1 = arith.constant 0 : i32
    return %c0_i32, %c0_i32_0 : i32, i32
  }
  func.func @transform_20(%arg0: i32) -> (i32, i32) {
    %c0_i32 = arith.constant 0 : i32
    %c0_i32_0 = arith.constant 0 : i32
    %c0_i32_1 = arith.constant 0 : i32
    return %c0_i32, %c0_i32_0 : i32, i32
  }
  func.func @transform_21(%arg0: i32) -> (i32, i32) {
    %c0_i32 = arith.constant 0 : i32
    %c0_i32_0 = arith.constant 0 : i32
    %c0_i32_1 = arith.constant 0 : i32
    return %c0_i32, %c0_i32_0 : i32, i32
  }
  func.func @transform_22(%arg0: i32) -> (i32, i32) {
    %c0_i32 = arith.constant 0 : i32
    %c0_i32_0 = arith.constant 0 : i32
    %c0_i32_1 = arith.constant 0 : i32
    return %c0_i32, %c0_i32_0 : i32, i32
  }
}

</mosaic_0001>

<llo_original>
// kernel: transformer_classifier.1
$region0: #{transformer_classifier.1}
  #allocation0 [shape = 'u32[]', space=smem, size = 0x4, offset = 0x4, fixed_abs, tag = 'smem constant byte address 0x4 - core index']
  #allocation1 [shape = 'u32[72,128]{1,0:T(1,128)}', space=vmem, size = 0x9000, scoped, tag = 'internal scratch']
  #allocation2 [shape = 'f32[16,32]{1,0:T(8,128)}', space=vmem, size = 0x2000, scoped, tag = 'scratch operand']
  #allocation3 [shape = 'f32[1,1]{1,0:T(1,128)S(1)}', space=vmem, size = 0x200, scoped, tag = 'scoped memory for transformer_classifier.1']
  %s0 = inlined_call_operand.vmem [shape: f32[16,32], index: 0, kind: input, shape index: {}]
  %s1 = inlined_call_operand.vmem [shape: f32[8,32], index: 1, kind: input, shape index: {}]
  %s2 = inlined_call_operand.vmem [shape: f32[64,64], index: 2, kind: input, shape index: {}]
  %s3 = inlined_call_operand.vmem [shape: f32[64,64], index: 3, kind: input, shape index: {}]
  %s4 = inlined_call_operand.vmem [shape: f32[2,1,32], index: 4, kind: input, shape index: {}]
  %s5 = inlined_call_operand.vmem [shape: f32[2,1,32], index: 5, kind: input, shape index: {}]
  %s6 = inlined_call_operand.vmem [shape: f32[2,12,32,8], index: 6, kind: input, shape index: {}]
  %s7 = inlined_call_operand.vmem [shape: f32[2,12,1,8], index: 7, kind: input, shape index: {}]
  %s8 = inlined_call_operand.vmem [shape: f32[2,4,8,32], index: 8, kind: input, shape index: {}]
  %s9 = inlined_call_operand.vmem [shape: f32[2,1,32], index: 9, kind: input, shape index: {}]
  %s10 = inlined_call_operand.vmem [shape: f32[2,1,32], index: 10, kind: input, shape index: {}]
  %s11 = inlined_call_operand.vmem [shape: f32[2,1,32], index: 11, kind: input, shape index: {}]
  %s12 = inlined_call_operand.vmem [shape: f32[2,32,96], index: 12, kind: input, shape index: {}]
  %s13 = inlined_call_operand.vmem [shape: f32[2,1,96], index: 13, kind: input, shape index: {}]
  %s14 = inlined_call_operand.vmem [shape: f32[2,96,32], index: 14, kind: input, shape index: {}]
  %s15 = inlined_call_operand.vmem [shape: f32[2,1,32], index: 15, kind: input, shape index: {}]
  %s16 = inlined_call_operand.vmem [shape: f32[1,32], index: 16, kind: input, shape index: {}]
  %s17 = inlined_call_operand.vmem [shape: f32[1,32], index: 17, kind: input, shape index: {}]
  %s18 = inlined_call_operand.vmem [shape: f32[1,32], index: 18, kind: input, shape index: {}]
  %s19 = inlined_call_operand.<no memory space> [shape: f32[1,1], index: 19, kind: input, shape index: {}]
  %s20 = inlined_call_operand.vmem [shape: f32[32,128], index: 20, kind: input, shape index: {}]
  %s21 = inlined_call_operand.vmem [shape: f32[1,128], index: 21, kind: input, shape index: {}]
  %s22 = inlined_call_operand.hbm [shape: f32[2,128], index: 22, kind: output, shape index: {}]
  %s23 = sld [smem:[#allocation0]]
  $region129: #{transformer_classifier.1} parent=0
    _
  %s25 = ssub.s32 1, %s23
  %s26 = scalar_select 0, %s25, %s23
  %v27 = vstv %s19
  %28 = vst [vmem:[#allocation3] sm:$0x1] %v27
  $region1: #{transformer_classifier.1} parent=0
    #allocation4 [shape = 'u8[1024]{0}', space=vmem, size = 0x400, scoped, tag = 'output window, operand 0, single buffered']
    #allocation5 [shape = 's32[2]{0}', space=sflag, size = 0x8, scoped, tag = 'scoped memory for transformer_classifier.1']
    %29 = vsyncpa [#allocation5], 0
    loop: start=0, step=1, limit=4
    $region2: #{transformer_classifier.1} parent=1 // loop_pre_header
      _
    $region3: #{transformer_classifier.1} parent=1 // loop_header
      %s31 = sphi 0, %s35
      %p32 = scmp.ge.s32.totalorder %s31, 4
      %s39 = sphi 0, %s39
      %s41 = sphi 0, %s39
      %s42 = sphi 0, %s41
      %s56 = sphi 0, %s42
      %s60 = sphi 0, %s60
      %s62 = sphi 0, %s60
      %s63 = sphi 0, %s62
      %s77 = sphi 0, %s63
      %s81 = sphi 0, %s81
      %s83 = sphi 0, %s81
      %s84 = sphi 0, %s83
      %s98 = sphi 0, %s84
      %s102 = sphi 0, %s102
      %s104 = sphi 0, %s102
      %s105 = sphi 0, %s104
      %s119 = sphi 0, %s105
      %s125 = sphi 0, %s127
      %s128 = sphi 0, %s125
      %s129 = sphi 0, %s128
      %s145 = sphi 0, %s129
      %s151 = sphi 0, %s153
      %s154 = sphi 0, %s151
      %s155 = sphi 0, %s154
      %s171 = sphi 0, %s155
      %s177 = sphi 0, %s179
      %s180 = sphi 0, %s177
      %s181 = sphi 0, %s180
      %s197 = sphi 0, %s181
      %s203 = sphi 0, %s205
      %s206 = sphi 0, %s203
      %s207 = sphi 0, %s206
      %s223 = sphi 0, %s207
      %s229 = sphi 0, %s231
      %s232 = sphi 0, %s229
      %s233 = sphi 0, %s232
      %s249 = sphi 0, %s233
      %s255 = sphi 0, %s257
      %s258 = sphi 0, %s255
      %s259 = sphi 0, %s258
      %s275 = sphi 0, %s259
      %s281 = sphi 0, %s283
      %s284 = sphi 0, %s281
      %s285 = sphi 0, %s284
      %s301 = sphi 0, %s285
      %s307 = sphi 0, %s309
      %s310 = sphi 0, %s307
      %s311 = sphi 0, %s310
      %s327 = sphi 0, %s311
      %s333 = sphi 0, %s335
      %s336 = sphi 0, %s333
      %s337 = sphi 0, %s336
      %s353 = sphi 0, %s337
      %s359 = sphi 0, %s361
      %s362 = sphi 0, %s359
      %s363 = sphi 0, %s362
      %s379 = sphi 0, %s363
      %s385 = sphi 0, %s387
      %s388 = sphi 0, %s385
      %s389 = sphi 0, %s388
      %s405 = sphi 0, %s389
      %s411 = sphi 0, %s413
      %s414 = sphi 0, %s411
      %s415 = sphi 0, %s414
      %s431 = sphi 0, %s415
      %s435 = sphi 0, %s435
      %s437 = sphi 0, %s435
      %s438 = sphi 0, %s437
      %s452 = sphi 0, %s438
      %s456 = sphi 0, %s456
      %s458 = sphi 0, %s456
      %s459 = sphi 0, %s458
      %s473 = sphi 0, %s459
      %s477 = sphi 0, %s477
      %s479 = sphi 0, %s477
      %s480 = sphi 0, %s479
      %s494 = sphi 0, %s480
      %s498 = sphi 0, %s498
      %s500 = sphi 0, %s498
      %s501 = sphi 0, %s500
      %s515 = sphi 0, %s501
      %s519 = sphi 0, %s519
      %s521 = sphi 0, %s519
      %s522 = sphi 0, %s521
      %s536 = sphi 0, %s522
      %s540 = sphi 0, %s540
      %s542 = sphi 0, %s540
      %s543 = sphi 0, %s542
      %s557 = sphi 0, %s543
      %s561 = sphi 0, %s561
      %s563 = sphi 0, %s561
      %s564 = sphi 0, %s563
      %s578 = sphi 0, %s564
    $region4: #{transformer_classifier.1} parent=1 // loop_header_branch
      %34 = sbr.rel (%p32) target = $region8
    $region5: #{transformer_classifier.1} parent=1 // loop_body
      %s36 = ssub.s32 %s31, 1
      %s37 = ssub.s32 %s31, 2
      %s38 = sadd.s32 %s31, 1
      %s40 = sadd.s32 %s39, 1
      %p43 = scmp.eq.s32.totalorder %s31, 1
      %p44 = scmp.ne.s32.totalorder %s39, %s41
      %p45 = scmp.eq.s32.totalorder %s31, 0
      %p46 = por %p44, %p45
      %p47 = scmp.ne.s32.totalorder %s39, %s41
      %p48 = scmp.eq.s32.totalorder %s36, 1
      %p49 = por %p47, %p48
      %p50 = scmp.ne.s32.totalorder %s41, %s42
      %p51 = scmp.eq.s32.totalorder %s36, 0
      %p52 = por %p50, %p51
      %p53 = scmp.ne.s32.totalorder %s41, %s42
      %p54 = scmp.eq.s32.totalorder %s37, 1
      %p55 = por %p53, %p54
      %p57 = scmp.ne.s32.totalorder %s42, %s56
      %p58 = scmp.eq.s32.totalorder %s37, 0
      %p59 = por %p57, %p58
      %s61 = sadd.s32 %s60, 1
      %p64 = scmp.eq.s32.totalorder %s31, 1
      %p65 = scmp.ne.s32.totalorder %s60, %s62
      %p66 = scmp.eq.s32.totalorder %s31, 0
      %p67 = por %p65, %p66
      %p68 = scmp.ne.s32.totalorder %s60, %s62
      %p69 = scmp.eq.s32.totalorder %s36, 1
      %p70 = por %p68, %p69
      %p71 = scmp.ne.s32.totalorder %s62, %s63
      %p72 = scmp.eq.s32.totalorder %s36, 0
      %p73 = por %p71, %p72
      %p74 = scmp.ne.s32.totalorder %s62, %s63
      %p75 = scmp.eq.s32.totalorder %s37, 1
      %p76 = por %p74, %p75
      %p78 = scmp.ne.s32.totalorder %s63, %s77
      %p79 = scmp.eq.s32.totalorder %s37, 0
      %p80 = por %p78, %p79
      %s82 = sadd.s32 %s81, 1
      %p85 = scmp.eq.s32.totalorder %s31, 1
      %p86 = scmp.ne.s32.totalorder %s81, %s83
      %p87 = scmp.eq.s32.totalorder %s31, 0
      %p88 = por %p86, %p87
      %p89 = scmp.ne.s32.totalorder %s81, %s83
      %p90 = scmp.eq.s32.totalorder %s36, 1
      %p91 = por %p89, %p90
      %p92 = scmp.ne.s32.totalorder %s83, %s84
      %p93 = scmp.eq.s32.totalorder %s36, 0
      %p94 = por %p92, %p93
      %p95 = scmp.ne.s32.totalorder %s83, %s84
      %p96 = scmp.eq.s32.totalorder %s37, 1
      %p97 = por %p95, %p96
      %p99 = scmp.ne.s32.totalorder %s84, %s98
      %p100 = scmp.eq.s32.totalorder %s37, 0
      %p101 = por %p99, %p100
      %s103 = sadd.s32 %s102, 1
      %p106 = scmp.eq.s32.totalorder %s31, 1
      %p107 = scmp.ne.s32.totalorder %s102, %s104
      %p108 = scmp.eq.s32.totalorder %s31, 0
      %p109 = por %p107, %p108
      %p110 = scmp.ne.s32.totalorder %s102, %s104
      %p111 = scmp.eq.s32.totalorder %s36, 1
      %p112 = por %p110, %p111
      %p113 = scmp.ne.s32.totalorder %s104, %s105
      %p114 = scmp.eq.s32.totalorder %s36, 0
      %p115 = por %p113, %p114
      %p116 = scmp.ne.s32.totalorder %s104, %s105
      %p117 = scmp.eq.s32.totalorder %s37, 1
      %p118 = por %p116, %p117
      %p120 = scmp.ne.s32.totalorder %s105, %s119
      %p121 = scmp.eq.s32.totalorder %s37, 0
      %p122 = por %p120, %p121
      %s123 = ssub.s32 %s31, %s38
      %p124 = scmp.eq.s32.totalorder %s123, 0
      %s126 = sadd.s32 %s125, 1
      %s127 = scalar_select %p124, %s125, %s126
      %p130 = pneg %p124
      %p131 = scmp.eq.s32.totalorder %s31, 1
      %p132 = por %p130, %p131
      %p133 = scmp.ne.s32.totalorder %s125, %s128
      %p134 = scmp.eq.s32.totalorder %s31, 0
      %p135 = por %p133, %p134
      %p136 = scmp.ne.s32.totalorder %s125, %s128
      %p137 = scmp.eq.s32.totalorder %s36, 1
      %p138 = por %p136, %p137
      %p139 = scmp.ne.s32.totalorder %s128, %s129
      %p140 = scmp.eq.s32.totalorder %s36, 0
      %p141 = por %p139, %p140
      %p142 = scmp.ne.s32.totalorder %s128, %s129
      %p143 = scmp.eq.s32.totalorder %s37, 1
      %p144 = por %p142, %p143
      %p146 = scmp.ne.s32.totalorder %s129, %s145
      %p147 = scmp.eq.s32.totalorder %s37, 0
      %p148 = por %p146, %p147
      %s149 = ssub.s32 %s31, %s38
      %p150 = scmp.eq.s32.totalorder %s149, 0
      %s152 = sadd.s32 %s151, 1
      %s153 = scalar_select %p150, %s151, %s152
      %p156 = pneg %p150
      %p157 = scmp.eq.s32.totalorder %s31, 1
      %p158 = por %p156, %p157
      %p159 = scmp.ne.s32.totalorder %s151, %s154
      %p160 = scmp.eq.s32.totalorder %s31, 0
      %p161 = por %p159, %p160
      %p162 = scmp.ne.s32.totalorder %s151, %s154
      %p163 = scmp.eq.s32.totalorder %s36, 1
      %p164 = por %p162, %p163
      %p165 = scmp.ne.s32.totalorder %s154, %s155
      %p166 = scmp.eq.s32.totalorder %s36, 0
      %p167 = por %p165, %p166
      %p168 = scmp.ne.s32.totalorder %s154, %s155
      %p169 = scmp.eq.s32.totalorder %s37, 1
      %p170 = por %p168, %p169
      %p172 = scmp.ne.s32.totalorder %s155, %s171
      %p173 = scmp.eq.s32.totalorder %s37, 0
      %p174 = por %p172, %p173
      %s175 = ssub.s32 %s31, %s38
      %p176 = scmp.eq.s32.totalorder %s175, 0
      %s178 = sadd.s32 %s177, 1
      %s179 = scalar_select %p176, %s177, %s178
      %p182 = pneg %p176
      %p183 = scmp.eq.s32.totalorder %s31, 1
      %p184 = por %p182, %p183
      %p185 = scmp.ne.s32.totalorder %s177, %s180
      %p186 = scmp.eq.s32.totalorder %s31, 0
      %p187 = por %p185, %p186
      %p188 = scmp.ne.s32.totalorder %s177, %s180
      %p189 = scmp.eq.s32.totalorder %s36, 1
      %p190 = por %p188, %p189
      %p191 = scmp.ne.s32.totalorder %s180, %s181
      %p192 = scmp.eq.s32.totalorder %s36, 0
      %p193 = por %p191, %p192
      %p194 = scmp.ne.s32.totalorder %s180, %s181
      %p195 = scmp.eq.s32.totalorder %s37, 1
      %p196 = por %p194, %p195
      %p198 = scmp.ne.s32.totalorder %s181, %s197
      %p199 = scmp.eq.s32.totalorder %s37, 0
      %p200 = por %p198, %p199
      %s201 = ssub.s32 %s31, %s38
      %p202 = scmp.eq.s32.totalorder %s201, 0
      %s204 = sadd.s32 %s203, 1
      %s205 = scalar_select %p202, %s203, %s204
      %p208 = pneg %p202
      %p209 = scmp.eq.s32.totalorder %s31, 1
      %p210 = por %p208, %p209
      %p211 = scmp.ne.s32.totalorder %s203, %s206
      %p212 = scmp.eq.s32.totalorder %s31, 0
      %p213 = por %p211, %p212
      %p214 = scmp.ne.s32.totalorder %s203, %s206
      %p215 = scmp.eq.s32.totalorder %s36, 1
      %p216 = por %p214, %p215
      %p217 = scmp.ne.s32.totalorder %s206, %s207
      %p218 = scmp.eq.s32.totalorder %s36, 0
      %p219 = por %p217, %p218
      %p220 = scmp.ne.s32.totalorder %s206, %s207
      %p221 = scmp.eq.s32.totalorder %s37, 1
      %p222 = por %p220, %p221
      %p224 = scmp.ne.s32.totalorder %s207, %s223
      %p225 = scmp.eq.s32.totalorder %s37, 0
      %p226 = por %p224, %p225
      %s227 = ssub.s32 %s31, %s38
      %p228 = scmp.eq.s32.totalorder %s227, 0
      %s230 = sadd.s32 %s229, 1
      %s231 = scalar_select %p228, %s229, %s230
      %p234 = pneg %p228
      %p235 = scmp.eq.s32.totalorder %s31, 1
      %p236 = por %p234, %p235
      %p237 = scmp.ne.s32.totalorder %s229, %s232
      %p238 = scmp.eq.s32.totalorder %s31, 0
      %p239 = por %p237, %p238
      %p240 = scmp.ne.s32.totalorder %s229, %s232
      %p241 = scmp.eq.s32.totalorder %s36, 1
      %p242 = por %p240, %p241
      %p243 = scmp.ne.s32.totalorder %s232, %s233
      %p244 = scmp.eq.s32.totalorder %s36, 0
      %p245 = por %p243, %p244
      %p246 = scmp.ne.s32.totalorder %s232, %s233
      %p247 = scmp.eq.s32.totalorder %s37, 1
      %p248 = por %p246, %p247
      %p250 = scmp.ne.s32.totalorder %s233, %s249
      %p251 = scmp.eq.s32.totalorder %s37, 0
      %p252 = por %p250, %p251
      %s253 = ssub.s32 %s31, %s38
      %p254 = scmp.eq.s32.totalorder %s253, 0
      %s256 = sadd.s32 %s255, 1
      %s257 = scalar_select %p254, %s255, %s256
      %p260 = pneg %p254
      %p261 = scmp.eq.s32.totalorder %s31, 1
      %p262 = por %p260, %p261
      %p263 = scmp.ne.s32.totalorder %s255, %s258
      %p264 = scmp.eq.s32.totalorder %s31, 0
      %p265 = por %p263, %p264
      %p266 = scmp.ne.s32.totalorder %s255, %s258
      %p267 = scmp.eq.s32.totalorder %s36, 1
      %p268 = por %p266, %p267
      %p269 = scmp.ne.s32.totalorder %s258, %s259
      %p270 = scmp.eq.s32.totalorder %s36, 0
      %p271 = por %p269, %p270
      %p272 = scmp.ne.s32.totalorder %s258, %s259
      %p273 = scmp.eq.s32.totalorder %s37, 1
      %p274 = por %p272, %p273
      %p276 = scmp.ne.s32.totalorder %s259, %s275
      %p277 = scmp.eq.s32.totalorder %s37, 0
      %p278 = por %p276, %p277
      %s279 = ssub.s32 %s31, %s38
      %p280 = scmp.eq.s32.totalorder %s279, 0
      %s282 = sadd.s32 %s281, 1
      %s283 = scalar_select %p280, %s281, %s282
      %p286 = pneg %p280
      %p287 = scmp.eq.s32.totalorder %s31, 1
      %p288 = por %p286, %p287
      %p289 = scmp.ne.s32.totalorder %s281, %s284
      %p290 = scmp.eq.s32.totalorder %s31, 0
      %p291 = por %p289, %p290
      %p292 = scmp.ne.s32.totalorder %s281, %s284
      %p293 = scmp.eq.s32.totalorder %s36, 1
      %p294 = por %p292, %p293
      %p295 = scmp.ne.s32.totalorder %s284, %s285
      %p296 = scmp.eq.s32.totalorder %s36, 0
      %p297 = por %p295, %p296
      %p298 = scmp.ne.s32.totalorder %s284, %s285
      %p299 = scmp.eq.s32.totalorder %s37, 1
      %p300 = por %p298, %p299
      %p302 = scmp.ne.s32.totalorder %s285, %s301
      %p303 = scmp.eq.s32.totalorder %s37, 0
      %p304 = por %p302, %p303
      %s305 = ssub.s32 %s31, %s38
      %p306 = scmp.eq.s32.totalorder %s305, 0
      %s308 = sadd.s32 %s307, 1
      %s309 = scalar_select %p306, %s307, %s308
      %p312 = pneg %p306
      %p313 = scmp.eq.s32.totalorder %s31, 1
      %p314 = por %p312, %p313
      %p315 = scmp.ne.s32.totalorder %s307, %s310
      %p316 = scmp.eq.s32.totalorder %s31, 0
      %p317 = por %p315, %p316
      %p318 = scmp.ne.s32.totalorder %s307, %s310
      %p319 = scmp.eq.s32.totalorder %s36, 1
      %p320 = por %p318, %p319
      %p321 = scmp.ne.s32.totalorder %s310, %s311
      %p322 = scmp.eq.s32.totalorder %s36, 0
      %p323 = por %p321, %p322
      %p324 = scmp.ne.s32.totalorder %s310, %s311
      %p325 = scmp.eq.s32.totalorder %s37, 1
      %p326 = por %p324, %p325
      %p328 = scmp.ne.s32.totalorder %s311, %s327
      %p329 = scmp.eq.s32.totalorder %s37, 0
      %p330 = por %p328, %p329
      %s331 = ssub.s32 %s31, %s38
      %p332 = scmp.eq.s32.totalorder %s331, 0
      %s334 = sadd.s32 %s333, 1
      %s335 = scalar_select %p332, %s333, %s334
      %p338 = pneg %p332
      %p339 = scmp.eq.s32.totalorder %s31, 1
      %p340 = por %p338, %p339
      %p341 = scmp.ne.s32.totalorder %s333, %s336
      %p342 = scmp.eq.s32.totalorder %s31, 0
      %p343 = por %p341, %p342
      %p344 = scmp.ne.s32.totalorder %s333, %s336
      %p345 = scmp.eq.s32.totalorder %s36, 1
      %p346 = por %p344, %p345
      %p347 = scmp.ne.s32.totalorder %s336, %s337
      %p348 = scmp.eq.s32.totalorder %s36, 0
      %p349 = por %p347, %p348
      %p350 = scmp.ne.s32.totalorder %s336, %s337
      %p351 = scmp.eq.s32.totalorder %s37, 1
      %p352 = por %p350, %p351
      %p354 = scmp.ne.s32.totalorder %s337, %s353
      %p355 = scmp.eq.s32.totalorder %s37, 0
      %p356 = por %p354, %p355
      %s357 = ssub.s32 %s31, %s38
      %p358 = scmp.eq.s32.totalorder %s357, 0
      %s360 = sadd.s32 %s359, 1
      %s361 = scalar_select %p358, %s359, %s360
      %p364 = pneg %p358
      %p365 = scmp.eq.s32.totalorder %s31, 1
      %p366 = por %p364, %p365
      %p367 = scmp.ne.s32.totalorder %s359, %s362
      %p368 = scmp.eq.s32.totalorder %s31, 0
      %p369 = por %p367, %p368
      %p370 = scmp.ne.s32.totalorder %s359, %s362
      %p371 = scmp.eq.s32.totalorder %s36, 1
      %p372 = por %p370, %p371
      %p373 = scmp.ne.s32.totalorder %s362, %s363
      %p374 = scmp.eq.s32.totalorder %s36, 0
      %p375 = por %p373, %p374
      %p376 = scmp.ne.s32.totalorder %s362, %s363
      %p377 = scmp.eq.s32.totalorder %s37, 1
      %p378 = por %p376, %p377
      %p380 = scmp.ne.s32.totalorder %s363, %s379
      %p381 = scmp.eq.s32.totalorder %s37, 0
      %p382 = por %p380, %p381
      %s383 = ssub.s32 %s31, %s38
      %p384 = scmp.eq.s32.totalorder %s383, 0
      %s386 = sadd.s32 %s385, 1
      %s387 = scalar_select %p384, %s385, %s386
      %p390 = pneg %p384
      %p391 = scmp.eq.s32.totalorder %s31, 1
      %p392 = por %p390, %p391
      %p393 = scmp.ne.s32.totalorder %s385, %s388
      %p394 = scmp.eq.s32.totalorder %s31, 0
      %p395 = por %p393, %p394
      %p396 = scmp.ne.s32.totalorder %s385, %s388
      %p397 = scmp.eq.s32.totalorder %s36, 1
      %p398 = por %p396, %p397
      %p399 = scmp.ne.s32.totalorder %s388, %s389
      %p400 = scmp.eq.s32.totalorder %s36, 0
      %p401 = por %p399, %p400
      %p402 = scmp.ne.s32.totalorder %s388, %s389
      %p403 = scmp.eq.s32.totalorder %s37, 1
      %p404 = por %p402, %p403
      %p406 = scmp.ne.s32.totalorder %s389, %s405
      %p407 = scmp.eq.s32.totalorder %s37, 0
      %p408 = por %p406, %p407
      %s409 = ssub.s32 %s31, %s38
      %p410 = scmp.eq.s32.totalorder %s409, 0
      %s412 = sadd.s32 %s411, 1
      %s413 = scalar_select %p410, %s411, %s412
      %p416 = pneg %p410
      %p417 = scmp.eq.s32.totalorder %s31, 1
      %p418 = por %p416, %p417
      %p419 = scmp.ne.s32.totalorder %s411, %s414
      %p420 = scmp.eq.s32.totalorder %s31, 0
      %p421 = por %p419, %p420
      %p422 = scmp.ne.s32.totalorder %s411, %s414
      %p423 = scmp.eq.s32.totalorder %s36, 1
      %p424 = por %p422, %p423
      %p425 = scmp.ne.s32.totalorder %s414, %s415
      %p426 = scmp.eq.s32.totalorder %s36, 0
      %p427 = por %p425, %p426
      %p428 = scmp.ne.s32.totalorder %s414, %s415
      %p429 = scmp.eq.s32.totalorder %s37, 1
      %p430 = por %p428, %p429
      %p432 = scmp.ne.s32.totalorder %s415, %s431
      %p433 = scmp.eq.s32.totalorder %s37, 0
      %p434 = por %p432, %p433
      %s436 = sadd.s32 %s435, 1
      %p439 = scmp.eq.s32.totalorder %s31, 1
      %p440 = scmp.ne.s32.totalorder %s435, %s437
      %p441 = scmp.eq.s32.totalorder %s31, 0
      %p442 = por %p440, %p441
      %p443 = scmp.ne.s32.totalorder %s435, %s437
      %p444 = scmp.eq.s32.totalorder %s36, 1
      %p445 = por %p443, %p444
      %p446 = scmp.ne.s32.totalorder %s437, %s438
      %p447 = scmp.eq.s32.totalorder %s36, 0
      %p448 = por %p446, %p447
      %p449 = scmp.ne.s32.totalorder %s437, %s438
      %p450 = scmp.eq.s32.totalorder %s37, 1
      %p451 = por %p449, %p450
      %p453 = scmp.ne.s32.totalorder %s438, %s452
      %p454 = scmp.eq.s32.totalorder %s37, 0
      %p455 = por %p453, %p454
      %s457 = sadd.s32 %s456, 1
      %p460 = scmp.eq.s32.totalorder %s31, 1
      %p461 = scmp.ne.s32.totalorder %s456, %s458
      %p462 = scmp.eq.s32.totalorder %s31, 0
      %p463 = por %p461, %p462
      %p464 = scmp.ne.s32.totalorder %s456, %s458
      %p465 = scmp.eq.s32.totalorder %s36, 1
      %p466 = por %p464, %p465
      %p467 = scmp.ne.s32.totalorder %s458, %s459
      %p468 = scmp.eq.s32.totalorder %s36, 0
      %p469 = por %p467, %p468
      %p470 = scmp.ne.s32.totalorder %s458, %s459
      %p471 = scmp.eq.s32.totalorder %s37, 1
      %p472 = por %p470, %p471
      %p474 = scmp.ne.s32.totalorder %s459, %s473
      %p475 = scmp.eq.s32.totalorder %s37, 0
      %p476 = por %p474, %p475
      %s478 = sadd.s32 %s477, 1
      %p481 = scmp.eq.s32.totalorder %s31, 1
      %p482 = scmp.ne.s32.totalorder %s477, %s479
      %p483 = scmp.eq.s32.totalorder %s31, 0
      %p484 = por %p482, %p483
      %p485 = scmp.ne.s32.totalorder %s477, %s479
      %p486 = scmp.eq.s32.totalorder %s36, 1
      %p487 = por %p485, %p486
      %p488 = scmp.ne.s32.totalorder %s479, %s480
      %p489 = scmp.eq.s32.totalorder %s36, 0
      %p490 = por %p488, %p489
      %p491 = scmp.ne.s32.totalorder %s479, %s480
      %p492 = scmp.eq.s32.totalorder %s37, 1
      %p493 = por %p491, %p492
      %p495 = scmp.ne.s32.totalorder %s480, %s494
      %p496 = scmp.eq.s32.totalorder %s37, 0
      %p497 = por %p495, %p496
      %s499 = sadd.s32 %s498, 1
      %p502 = scmp.eq.s32.totalorder %s31, 1
      %p503 = scmp.ne.s32.totalorder %s498, %s500
      %p504 = scmp.eq.s32.totalorder %s31, 0
      %p505 = por %p503, %p504
      %p506 = scmp.ne.s32.totalorder %s498, %s500
      %p507 = scmp.eq.s32.totalorder %s36, 1
      %p508 = por %p506, %p507
      %p509 = scmp.ne.s32.totalorder %s500, %s501
      %p510 = scmp.eq.s32.totalorder %s36, 0
      %p511 = por %p509, %p510
      %p512 = scmp.ne.s32.totalorder %s500, %s501
      %p513 = scmp.eq.s32.totalorder %s37, 1
      %p514 = por %p512, %p513
      %p516 = scmp.ne.s32.totalorder %s501, %s515
      %p517 = scmp.eq.s32.totalorder %s37, 0
      %p518 = por %p516, %p517
      %s520 = sadd.s32 %s519, 1
      %p523 = scmp.eq.s32.totalorder %s31, 1
      %p524 = scmp.ne.s32.totalorder %s519, %s521
      %p525 = scmp.eq.s32.totalorder %s31, 0
      %p526 = por %p524, %p525
      %p527 = scmp.ne.s32.totalorder %s519, %s521
      %p528 = scmp.eq.s32.totalorder %s36, 1
      %p529 = por %p527, %p528
      %p530 = scmp.ne.s32.totalorder %s521, %s522
      %p531 = scmp.eq.s32.totalorder %s36, 0
      %p532 = por %p530, %p531
      %p533 = scmp.ne.s32.totalorder %s521, %s522
      %p534 = scmp.eq.s32.totalorder %s37, 1
      %p535 = por %p533, %p534
      %p537 = scmp.ne.s32.totalorder %s522, %s536
      %p538 = scmp.eq.s32.totalorder %s37, 0
      %p539 = por %p537, %p538
      %s541 = sadd.s32 %s540, 1
      %p544 = scmp.eq.s32.totalorder %s31, 1
      %p545 = scmp.ne.s32.totalorder %s540, %s542
      %p546 = scmp.eq.s32.totalorder %s31, 0
      %p547 = por %p545, %p546
      %p548 = scmp.ne.s32.totalorder %s540, %s542
      %p549 = scmp.eq.s32.totalorder %s36, 1
      %p550 = por %p548, %p549
      %p551 = scmp.ne.s32.totalorder %s542, %s543
      %p552 = scmp.eq.s32.totalorder %s36, 0
      %p553 = por %p551, %p552
      %p554 = scmp.ne.s32.totalorder %s542, %s543
      %p555 = scmp.eq.s32.totalorder %s37, 1
      %p556 = por %p554, %p555
      %p558 = scmp.ne.s32.totalorder %s543, %s557
      %p559 = scmp.eq.s32.totalorder %s37, 0
      %p560 = por %p558, %p559
      %s562 = sadd.s32 %s561, 1
      %p565 = scmp.eq.s32.totalorder %s31, 1
      %p566 = scmp.ne.s32.totalorder %s561, %s563
      %p567 = scmp.eq.s32.totalorder %s31, 0
      %p568 = por %p566, %p567
      %p569 = scmp.ne.s32.totalorder %s561, %s563
      %p570 = scmp.eq.s32.totalorder %s36, 1
      %p571 = por %p569, %p570
      %p572 = scmp.ne.s32.totalorder %s563, %s564
      %p573 = scmp.eq.s32.totalorder %s36, 0
      %p574 = por %p572, %p573
      %p575 = scmp.ne.s32.totalorder %s563, %s564
      %p576 = scmp.eq.s32.totalorder %s37, 1
      %p577 = por %p575, %p576
      %p579 = scmp.ne.s32.totalorder %s564, %s578
      %p580 = scmp.eq.s32.totalorder %s37, 0
      %p581 = por %p579, %p580
      %p582 = scmp.le.s32.totalorder 1, %s31
      %p583 = scmp.lt.s32.totalorder %s31, 3
      %p584 = pnand %p582, %p583
      %p585 = pneg %p584
      // Predicated region
      $region9: #{transformer_classifier.1} parent=5 // pred_check
        _
      $region10: #{transformer_classifier.1} parent=5 // pred_check_branch
        %587 = sbr.rel (%p584) target = $region12
      $region11: #{transformer_classifier.1} parent=5 // pred_region
        %s588 = ssub.s32 %s31, 1
        // Predicated region
        $region13: #{transformer_classifier.1} parent=11 // pred_check
          %p589 = pneg %p52
        $region14: #{transformer_classifier.1} parent=11 // pred_check_branch
          %591 = sbr.rel (%p589) target = $region16
        $region15: #{transformer_classifier.1} parent=11 // pred_region
          _
        $region16: #{transformer_classifier.1} parent=11 // pred_fallthru
          _
        // Predicated region
        $region17: #{transformer_classifier.1} parent=11 // pred_check
          %p592 = pneg %p73
        $region18: #{transformer_classifier.1} parent=11 // pred_check_branch
          %594 = sbr.rel (%p592) target = $region20
        $region19: #{transformer_classifier.1} parent=11 // pred_region
          _
        $region20: #{transformer_classifier.1} parent=11 // pred_fallthru
          _
        // Predicated region
        $region21: #{transformer_classifier.1} parent=11 // pred_check
          %p595 = pneg %p94
        $region22: #{transformer_classifier.1} parent=11 // pred_check_branch
          %597 = sbr.rel (%p595) target = $region24
        $region23: #{transformer_classifier.1} parent=11 // pred_region
          _
        $region24: #{transformer_classifier.1} parent=11 // pred_fallthru
          _
        // Predicated region
        $region25: #{transformer_classifier.1} parent=11 // pred_check
          %p598 = pneg %p115
        $region26: #{transformer_classifier.1} parent=11 // pred_check_branch
          %600 = sbr.rel (%p598) target = $region28
        $region27: #{transformer_classifier.1} parent=11 // pred_region
          _
        $region28: #{transformer_classifier.1} parent=11 // pred_fallthru
          _
        // Predicated region
        $region29: #{transformer_classifier.1} parent=11 // pred_check
          %p601 = pneg %p448
        $region30: #{transformer_classifier.1} parent=11 // pred_check_branch
          %603 = sbr.rel (%p601) target = $region32
        $region31: #{transformer_classifier.1} parent=11 // pred_region
          _
        $region32: #{transformer_classifier.1} parent=11 // pred_fallthru
          _
        // Predicated region
        $region33: #{transformer_classifier.1} parent=11 // pred_check
          %p604 = pneg %p469
        $region34: #{transformer_classifier.1} parent=11 // pred_check_branch
          %606 = sbr.rel (%p604) target = $region36
        $region35: #{transformer_classifier.1} parent=11 // pred_region
          _
        $region36: #{transformer_classifier.1} parent=11 // pred_fallthru
          _
        // Predicated region
        $region37: #{transformer_classifier.1} parent=11 // pred_check
          %p607 = pneg %p490
        $region38: #{transformer_classifier.1} parent=11 // pred_check_branch
          %609 = sbr.rel (%p607) target = $region40
        $region39: #{transformer_classifier.1} parent=11 // pred_region
          _
        $region40: #{transformer_classifier.1} parent=11 // pred_fallthru
          _
        // Predicated region
        $region41: #{transformer_classifier.1} parent=11 // pred_check
          %p610 = pneg %p511
        $region42: #{transformer_classifier.1} parent=11 // pred_check_branch
          %612 = sbr.rel (%p610) target = $region44
        $region43: #{transformer_classifier.1} parent=11 // pred_region
          _
        $region44: #{transformer_classifier.1} parent=11 // pred_fallthru
          _
        // Predicated region
        $region45: #{transformer_classifier.1} parent=11 // pred_check
          %p613 = pneg %p532
        $region46: #{transformer_classifier.1} parent=11 // pred_check_branch
          %615 = sbr.rel (%p613) target = $region48
        $region47: #{transformer_classifier.1} parent=11 // pred_region
          _
        $region48: #{transformer_classifier.1} parent=11 // pred_fallthru
          _
        // Predicated region
        $region49: #{transformer_classifier.1} parent=11 // pred_check
          %p616 = pneg %p553
        $region50: #{transformer_classifier.1} parent=11 // pred_check_branch
          %618 = sbr.rel (%p616) target = $region52
        $region51: #{transformer_classifier.1} parent=11 // pred_region
          _
        $region52: #{transformer_classifier.1} parent=11 // pred_fallthru
          _
      $region12: #{transformer_classifier.1} parent=5 // pred_fallthru
        _
      %p619 = scmp.lt.s32.totalorder %s31, 2
      // Predicated region
      $region53: #{transformer_classifier.1} parent=5 // pred_check
        %p620 = pneg %p619
      $region54: #{transformer_classifier.1} parent=5 // pred_check_branch
        %622 = sbr.rel (%p620) target = $region56
      $region55: #{transformer_classifier.1} parent=5 // pred_region
        // Predicated region
        $region57: #{transformer_classifier.1} parent=55 // pred_check
          %p623 = pneg %p135
        $region58: #{transformer_classifier.1} parent=55 // pred_check_branch
          %625 = sbr.rel (%p623) target = $region60
        $region59: #{transformer_classifier.1} parent=55 // pred_region
          %p626 = scmp.lt.s32.totalorder %s31, 1
          %s627 = scalar_select %p626, %s31, 1
          %s628 = scalar_lea.vmem %s4, %s627
        $region60: #{transformer_classifier.1} parent=55 // pred_fallthru
          _
        // Predicated region
        $region61: #{transformer_classifier.1} parent=55 // pred_check
          %p629 = pneg %p161
        $region62: #{transformer_classifier.1} parent=55 // pred_check_branch
          %631 = sbr.rel (%p629) target = $region64
        $region63: #{transformer_classifier.1} parent=55 // pred_region
          %p632 = scmp.lt.s32.totalorder %s31, 1
          %s633 = scalar_select %p632, %s31, 1
          %s634 = scalar_lea.vmem %s5, %s633
        $region64: #{transformer_classifier.1} parent=55 // pred_fallthru
          _
        // Predicated region
        $region65: #{transformer_classifier.1} parent=55 // pred_check
          %p635 = pneg %p187
        $region66: #{transformer_classifier.1} parent=55 // pred_check_branch
          %637 = sbr.rel (%p635) target = $region68
        $region67: #{transformer_classifier.1} parent=55 // pred_region
          %p638 = scmp.lt.s32.totalorder %s31, 1
          %s639 = scalar_select %p638, %s31, 1
          %s640 = smul.addr %s639, 48
          %s641 = smul.addr %s640, 8
          %s642 = scalar_lea.vmem %s6, %s641
        $region68: #{transformer_classifier.1} parent=55 // pred_fallthru
          _
        // Predicated region
        $region69: #{transformer_classifier.1} parent=55 // pred_check
          %p643 = pneg %p213
        $region70: #{transformer_classifier.1} parent=55 // pred_check_branch
          %645 = sbr.rel (%p643) target = $region72
        $region71: #{transformer_classifier.1} parent=55 // pred_region
          %p646 = scmp.lt.s32.totalorder %s31, 1
          %s647 = scalar_select %p646, %s31, 1
          %s648 = smul.addr %s647, 12
          %s649 = scalar_lea.vmem %s7, %s648
        $region72: #{transformer_classifier.1} parent=55 // pred_fallthru
          _
        // Predicated region
        $region73: #{transformer_classifier.1} parent=55 // pred_check
          %p650 = pneg %p239
        $region74: #{transformer_classifier.1} parent=55 // pred_check_branch
          %652 = sbr.rel (%p650) target = $region76
        $region75: #{transformer_classifier.1} parent=55 // pred_region
          %p653 = scmp.lt.s32.totalorder %s31, 1
          %s654 = scalar_select %p653, %s31, 1
          %s655 = smul.addr %s654, 4
          %s656 = smul.addr %s655, 8
          %s657 = scalar_lea.vmem %s8, %s656
        $region76: #{transformer_classifier.1} parent=55 // pred_fallthru
          _
        // Predicated region
        $region77: #{transformer_classifier.1} parent=55 // pred_check
          %p658 = pneg %p265
        $region78: #{transformer_classifier.1} parent=55 // pred_check_branch
          %660 = sbr.rel (%p658) target = $region80
        $region79: #{transformer_classifier.1} parent=55 // pred_region
          %p661 = scmp.lt.s32.totalorder %s31, 1
          %s662 = scalar_select %p661, %s31, 1
          %s663 = scalar_lea.vmem %s9, %s662
        $region80: #{transformer_classifier.1} parent=55 // pred_fallthru
          _
        // Predicated region
        $region81: #{transformer_classifier.1} parent=55 // pred_check
          %p664 = pneg %p291
        $region82: #{transformer_classifier.1} parent=55 // pred_check_branch
          %666 = sbr.rel (%p664) target = $region84
        $region83: #{transformer_classifier.1} parent=55 // pred_region
          %p667 = scmp.lt.s32.totalorder %s31, 1
          %s668 = scalar_select %p667, %s31, 1
          %s669 = scalar_lea.vmem %s10, %s668
        $region84: #{transformer_classifier.1} parent=55 // pred_fallthru
          _
        // Predicated region
        $region85: #{transformer_classifier.1} parent=55 // pred_check
          %p670 = pneg %p317
        $region86: #{transformer_classifier.1} parent=55 // pred_check_branch
          %672 = sbr.rel (%p670) target = $region88
        $region87: #{transformer_classifier.1} parent=55 // pred_region
          %p673 = scmp.lt.s32.totalorder %s31, 1
          %s674 = scalar_select %p673, %s31, 1
          %s675 = scalar_lea.vmem %s11, %s674
        $region88: #{transformer_classifier.1} parent=55 // pred_fallthru
          _
        // Predicated region
        $region89: #{transformer_classifier.1} parent=55 // pred_check
          %p676 = pneg %p343
        $region90: #{transformer_classifier.1} parent=55 // pred_check_branch
          %678 = sbr.rel (%p676) target = $region92
        $region91: #{transformer_classifier.1} parent=55 // pred_region
          %p679 = scmp.lt.s32.totalorder %s31, 1
          %s680 = scalar_select %p679, %s31, 1
          %s681 = smul.addr %s680, 4
          %s682 = smul.addr %s681, 8
          %s683 = scalar_lea.vmem %s12, %s682
        $region92: #{transformer_classifier.1} parent=55 // pred_fallthru
          _
        // Predicated region
        $region93: #{transformer_classifier.1} parent=55 // pred_check
          %p684 = pneg %p369
        $region94: #{transformer_classifier.1} parent=55 // pred_check_branch
          %686 = sbr.rel (%p684) target = $region96
        $region95: #{transformer_classifier.1} parent=55 // pred_region
          %p687 = scmp.lt.s32.totalorder %s31, 1
          %s688 = scalar_select %p687, %s31, 1
          %s689 = scalar_lea.vmem %s13, %s688
        $region96: #{transformer_classifier.1} parent=55 // pred_fallthru
          _
        // Predicated region
        $region97: #{transformer_classifier.1} parent=55 // pred_check
          %p690 = pneg %p395
        $region98: #{transformer_classifier.1} parent=55 // pred_check_branch
          %692 = sbr.rel (%p690) target = $region100
        $region99: #{transformer_classifier.1} parent=55 // pred_region
          %p693 = scmp.lt.s32.totalorder %s31, 1
          %s694 = scalar_select %p693, %s31, 1
          %s695 = smul.addr %s694, 12
          %s696 = smul.addr %s695, 8
          %s697 = scalar_lea.vmem %s14, %s696
        $region100: #{transformer_classifier.1} parent=55 // pred_fallthru
          _
        // Predicated region
        $region101: #{transformer_classifier.1} parent=55 // pred_check
          %p698 = pneg %p421
        $region102: #{transformer_classifier.1} parent=55 // pred_check_branch
          %700 = sbr.rel (%p698) target = $region104
        $region103: #{transformer_classifier.1} parent=55 // pred_region
          %p701 = scmp.lt.s32.totalorder %s31, 1
          %s702 = scalar_select %p701, %s31, 1
          %s703 = scalar_lea.vmem %s15, %s702
        $region104: #{transformer_classifier.1} parent=55 // pred_fallthru
          _
      $region56: #{transformer_classifier.1} parent=5 // pred_fallthru
        _
      %p704 = scmp.le.s32.totalorder 1, %s31
      %p705 = scmp.lt.s32.totalorder %s31, 3
      %p706 = pnand %p704, %p705
      %p707 = pneg %p706
      // Predicated region
      $region105: #{transformer_classifier.1} parent=5 // pred_check
        _
      $region106: #{transformer_classifier.1} parent=5 // pred_check_branch
        %709 = sbr.rel (%p706) target = $region108
      $region107: #{transformer_classifier.1} parent=5 // pred_region
        %s710 = ssub.s32 %s31, 1
        %p711 = pneg %p52
        %p712 = pneg %p49
        %p713 = pneg %p73
        %p714 = pneg %p70
        %p715 = pneg %p94
        %p716 = pneg %p91
        %p717 = pneg %p115
        %p718 = pneg %p112
        %p719 = scmp.lt.s32.totalorder %s36, 1
        %s720 = scalar_select %p719, %s36, 1
        %s721 = scalar_lea.vmem %s4, %s720
        %p722 = pneg %p141
        %p723 = pneg %p138
        %p724 = scmp.lt.s32.totalorder %s36, 1
        %s725 = scalar_select %p724, %s36, 1
        %s726 = scalar_lea.vmem %s5, %s725
        %p727 = pneg %p167
        %p728 = pneg %p164
        %p729 = scmp.lt.s32.totalorder %s36, 1
        %s730 = scalar_select %p729, %s36, 1
        %s731 = smul.addr %s730, 48
        %s732 = smul.addr %s731, 8
        %s733 = scalar_lea.vmem %s6, %s732
        %p734 = pneg %p193
        %p735 = pneg %p190
        %p736 = scmp.lt.s32.totalorder %s36, 1
        %s737 = scalar_select %p736, %s36, 1
        %s738 = smul.addr %s737, 12
        %s739 = scalar_lea.vmem %s7, %s738
        %p740 = pneg %p219
        %p741 = pneg %p216
        %p742 = scmp.lt.s32.totalorder %s36, 1
        %s743 = scalar_select %p742, %s36, 1
        %s744 = smul.addr %s743, 4
        %s745 = smul.addr %s744, 8
        %s746 = scalar_lea.vmem %s8, %s745
        %p747 = pneg %p245
        %p748 = pneg %p242
        %p749 = scmp.lt.s32.totalorder %s36, 1
        %s750 = scalar_select %p749, %s36, 1
        %s751 = scalar_lea.vmem %s9, %s750
        %p752 = pneg %p271
        %p753 = pneg %p268
        %p754 = scmp.lt.s32.totalorder %s36, 1
        %s755 = scalar_select %p754, %s36, 1
        %s756 = scalar_lea.vmem %s10, %s755
        %p757 = pneg %p297
        %p758 = pneg %p294
        %p759 = scmp.lt.s32.totalorder %s36, 1
        %s760 = scalar_select %p759, %s36, 1
        %s761 = scalar_lea.vmem %s11, %s760
        %p762 = pneg %p323
        %p763 = pneg %p320
        %p764 = scmp.lt.s32.totalorder %s36, 1
        %s765 = scalar_select %p764, %s36, 1
        %s766 = smul.addr %s765, 4
        %s767 = smul.addr %s766, 8
        %s768 = scalar_lea.vmem %s12, %s767
        %p769 = pneg %p349
        %p770 = pneg %p346
        %p771 = scmp.lt.s32.totalorder %s36, 1
        %s772 = scalar_select %p771, %s36, 1
        %s773 = scalar_lea.vmem %s13, %s772
        %p774 = pneg %p375
        %p775 = pneg %p372
        %p776 = scmp.lt.s32.totalorder %s36, 1
        %s777 = scalar_select %p776, %s36, 1
        %s778 = smul.addr %s777, 12
        %s779 = smul.addr %s778, 8
        %s780 = scalar_lea.vmem %s14, %s779
        %p781 = pneg %p401
        %p782 = pneg %p398
        %p783 = scmp.lt.s32.totalorder %s36, 1
        %s784 = scalar_select %p783, %s36, 1
        %s785 = scalar_lea.vmem %s15, %s784
        %p786 = pneg %p427
        %p787 = pneg %p424
        %p788 = pneg %p448
        %p789 = pneg %p445
        %p790 = pneg %p469
        %p791 = pneg %p466
        %p792 = pneg %p490
        %p793 = pneg %p487
        %p794 = pneg %p511
        %p795 = pneg %p508
        %p796 = pneg %p532
        %p797 = pneg %p529
        %p798 = pneg %p553
        %p799 = pneg %p550
        %p800 = pneg %p574
        %p801 = pneg %p571
        %p802 = scmp.lt.s32.totalorder %s36, 1
        %s803 = scalar_select %p802, %s36, 1
        %s804 = scalar_lea.vmem %s4, %s803
        %p805 = scmp.lt.s32.totalorder %s36, 1
        %s806 = scalar_select %p805, %s36, 1
        %s807 = scalar_lea.vmem %s5, %s806
        %p808 = scmp.lt.s32.totalorder %s36, 1
        %s809 = scalar_select %p808, %s36, 1
        %s810 = smul.addr %s809, 48
        %s811 = smul.addr %s810, 8
        %s812 = scalar_lea.vmem %s6, %s811
        %p813 = scmp.lt.s32.totalorder %s36, 1
        %s814 = scalar_select %p813, %s36, 1
        %s815 = smul.addr %s814, 12
        %s816 = scalar_lea.vmem %s7, %s815
        %p817 = scmp.lt.s32.totalorder %s36, 1
        %s818 = scalar_select %p817, %s36, 1
        %s819 = smul.addr %s818, 4
        %s820 = smul.addr %s819, 8
        %s821 = scalar_lea.vmem %s8, %s820
        %p822 = scmp.lt.s32.totalorder %s36, 1
        %s823 = scalar_select %p822, %s36, 1
        %s824 = scalar_lea.vmem %s9, %s823
        %p825 = scmp.lt.s32.totalorder %s36, 1
        %s826 = scalar_select %p825, %s36, 1
        %s827 = scalar_lea.vmem %s10, %s826
        %p828 = scmp.lt.s32.totalorder %s36, 1
        %s829 = scalar_select %p828, %s36, 1
        %s830 = scalar_lea.vmem %s11, %s829
        %p831 = scmp.lt.s32.totalorder %s36, 1
        %s832 = scalar_select %p831, %s36, 1
        %s833 = smul.addr %s832, 4
        %s834 = smul.addr %s833, 8
        %s835 = scalar_lea.vmem %s12, %s834
        %p836 = scmp.lt.s32.totalorder %s36, 1
        %s837 = scalar_select %p836, %s36, 1
        %s838 = scalar_lea.vmem %s13, %s837
        %p839 = scmp.lt.s32.totalorder %s36, 1
        %s840 = scalar_select %p839, %s36, 1
        %s841 = smul.addr %s840, 12
        %s842 = smul.addr %s841, 8
        %s843 = scalar_lea.vmem %s14, %s842
        %p844 = scmp.lt.s32.totalorder %s36, 1
        %s845 = scalar_select %p844, %s36, 1
        %s846 = scalar_lea.vmem %s15, %s845
        %p847 = scmp.eq.s32.totalorder %s36, 0
        // Predicated region
        $region109: #{transformer_classifier.1} parent=107 // pred_check
          %p848 = pneg %p847
        $region110: #{transformer_classifier.1} parent=107 // pred_check_branch
          %850 = sbr.rel (%p848) target = $region112
        $region111: #{transformer_classifier.1} parent=107 // pred_region
          %v851 = vld [vmem:[%s0] sm:$0xff]
          %v852 = vld [vmem:[%s0 + $0x8] sm:$0xff]
          %v853 = vld [vmem:[%s1] sm:$0xff]
          %v854 = vadd.f32 %v851, %v853
          %v855 = vadd.f32 %v852, %v853
          %vm856 = vcmask 261120
          %857 = vst.msk [vmem:[#allocation2] sm:$0xff] %vm856, %v854
          %858 = vst.msk [vmem:[#allocation2 + $0x8] sm:$0xff] %vm856, %v855
        $region112: #{transformer_classifier.1} parent=107 // pred_fallthru
          _
        %v859 = vld [vmem:[#allocation2] sm:$0xff]
        %v860 = vld [vmem:[#allocation2 + $0x8] sm:$0xff]
        %v861 = vld [vmem:[%s804] sm:$0x1]
        %v862 = vld [vmem:[%s807] sm:$0x1]
        %vm863 = vcmask 261120
        %v864 = vsel %vm863, %v859, 0.0
        %865 = vadd.xlane.f32.xlu0 %v864
        %v866 = vpop.xlane.xlu0 %865
        %v867 = vsel %vm863, %v860, 0.0
        %868 = vadd.xlane.f32.xlu0 %v867
        %v869 = vpop.xlane.xlu0 %868
        %v870 = vrcp.pop 32.0
        %v871 = vmul.f32 32.0, %v870
        %v872 = vsub.f32 1.0, %v871
        %v873 = vmul.f32 %v870, %v872
        %v874 = vadd.f32 %v870, %v873
        %vm875 = vweird.f32 %v870
        %v876 = vsel %vm875, %v870, %v874
        %v877 = vmul.f32 %v866, %v876
        %v878 = vmul.f32 %v869, %v876
        %v879 = vsub.f32 %v859, %v877
        %v880 = vsub.f32 %v860, %v878
        %v881 = vmul.f32 %v879, %v879
        %v882 = vmul.f32 %v880, %v880
        %v883 = vsel %vm863, %v881, 0.0
        %884 = vadd.xlane.f32.xlu0 %v883
        %v885 = vpop.xlane.xlu0 %884
        %v886 = vsel %vm863, %v882, 0.0
        %887 = vadd.xlane.f32.xlu0 %v886
        %v888 = vpop.xlane.xlu0 %887
        %v889 = vmul.f32 %v885, %v876
        %v890 = vmul.f32 %v888, %v876
        %v891 = vadd.f32 %v889, 1e-05
        %v892 = vadd.f32 %v890, 1e-05
        %v893 = vrsqrt.pop %v891
        %v894 = vmul.f32 %v893, %v891
        %v895 = vmul.f32 %v894, %v893
        %v896 = vmul.f32 0.5, %v895
        %v897 = vsub.f32 1.5, %v896
        %v898 = vmul.f32 %v893, %v897
        %vm899 = vweird.f32 %v891
        %vm900 = vweird.f32 %v893
        %vm901 = vmor %vm899, %vm900
        %v902 = vsel %vm901, %v893, %v898
        %v903 = vrsqrt.pop %v892
        %v904 = vmul.f32 %v903, %v892
        %v905 = vmul.f32 %v904, %v903
        %v906 = vmul.f32 0.5, %v905
        %v907 = vsub.f32 1.5, %v906
        %v908 = vmul.f32 %v903, %v907
        %vm909 = vweird.f32 %v892
        %vm910 = vweird.f32 %v903
        %vm911 = vmor %vm909, %vm910
        %v912 = vsel %vm911, %v903, %v908
        %v913 = vmul.f32 %v879, %v902
        %v914 = vmul.f32 %v880, %v912
        %v916 = vperm.slane %v861, 0
        %v918 = vmul.f32 %v913, %v916
        %v919 = vmul.f32 %v914, %v916
        %v921 = vperm.slane %v862, 0
        %v923 = vadd.f32 %v918, %v921
        %v924 = vadd.f32 %v919, %v921
        %v925 = vld [vmem:[%s812] sm:$0xff]
        %v926 = vld [vmem:[%s812 + $0x8] sm:$0xff]
        %v927 = vld [vmem:[%s812 + $0x10] sm:$0xff]
        %v928 = vld [vmem:[%s812 + $0x18] sm:$0xff]
        %v929 = vld [vmem:[%s816] sm:$0x1]
        %v931 = vperm.slane %v929, 0
        %v934 = vsel %vm863, %v923, 0
        %v937 = vsel %vm863, %v924, 0
        %939 = vmatpush.msra.mxu0 0.0
        %940 = vmatpush.msra.mxu0 0.0
        %941 = vmatpush.msra.mxu0 0.0
        %942 = vmatpush.msra.mxu0 0.0
        %943 = vmatpush.msra.mxu0 0.0
        %944 = vmatpush.msra.mxu0 0.0
        %945 = vmatpush.msra.mxu0 0.0
        %946 = vmatpush.msra.mxu0 0.0
        %947 = vmatpush.msra.mxu0 0.0
        %948 = vmatpush.msra.mxu0 0.0
        %949 = vmatpush.msra.mxu0 0.0
        %950 = vmatpush.msra.mxu0 0.0
        %951 = vmatpush.msra.mxu0 %v928
        %952 = vmatpush.msra.mxu0 %v927
        %953 = vmatpush.msra.mxu0 %v926
        %954 = vmatpush.msra.mxu0 %v925
        %955 = vmatmul.f32.gmra.mxu0 %v934
        %v956 = vpop.f32.mrf.mxu0
        %v957 = vadd.f32 %v931, %v956
        %958 = vmatmul.f32.gmra.mxu0 %v937
        %v959 = vpop.f32.mrf.mxu0
        %v960 = vadd.f32 %v931, %v959
        %961 = vdwg.mxu0
        %s962 = scalar_lea.vmem %s812, 32
        %v963 = vld [vmem:[%s962] sm:$0xff]
        %v964 = vld [vmem:[%s962 + $0x8] sm:$0xff]
        %v965 = vld [vmem:[%s962 + $0x10] sm:$0xff]
        %v966 = vld [vmem:[%s962 + $0x18] sm:$0xff]
        %s967 = scalar_lea.vmem %s816, 1
        %v968 = vld [vmem:[%s967] sm:$0x1]
        %v970 = vperm.slane %v968, 0
        %972 = vmatpush.msra.mxu0 0.0
        %973 = vmatpush.msra.mxu0 0.0
        %974 = vmatpush.msra.mxu0 0.0
        %975 = vmatpush.msra.mxu0 0.0
        %976 = vmatpush.msra.mxu0 0.0
        %977 = vmatpush.msra.mxu0 0.0
        %978 = vmatpush.msra.mxu0 0.0
        %979 = vmatpush.msra.mxu0 0.0
        %980 = vmatpush.msra.mxu0 0.0
        %981 = vmatpush.msra.mxu0 0.0
        %982 = vmatpush.msra.mxu0 0.0
        %983 = vmatpush.msra.mxu0 0.0
        %984 = vmatpush.msra.mxu0 %v966
        %985 = vmatpush.msra.mxu0 %v965
        %986 = vmatpush.msra.mxu0 %v964
        %987 = vmatpush.msra.mxu0 %v963
        %988 = vmatmul.f32.gmra.mxu0 %v934
        %v989 = vpop.f32.mrf.mxu0
        %v990 = vadd.f32 %v970, %v989
        %991 = vmatmul.f32.gmra.mxu0 %v937
        %v992 = vpop.f32.mrf.mxu0
        %v993 = vadd.f32 %v970, %v992
        %994 = vdwg.mxu0
        %s995 = scalar_lea.vmem %s812, 64
        %v996 = vld [vmem:[%s995] sm:$0xff]
        %v997 = vld [vmem:[%s995 + $0x8] sm:$0xff]
        %v998 = vld [vmem:[%s995 + $0x10] sm:$0xff]
        %v999 = vld [vmem:[%s995 + $0x18] sm:$0xff]
        %s1000 = scalar_lea.vmem %s816, 2
        %v1001 = vld [vmem:[%s1000] sm:$0x1]
        %v1003 = vperm.slane %v1001, 0
        %1005 = vmatpush.msra.mxu0 0.0
        %1006 = vmatpush.msra.mxu0 0.0
        %1007 = vmatpush.msra.mxu0 0.0
        %1008 = vmatpush.msra.mxu0 0.0
        %1009 = vmatpush.msra.mxu0 0.0
        %1010 = vmatpush.msra.mxu0 0.0
        %1011 = vmatpush.msra.mxu0 0.0
        %1012 = vmatpush.msra.mxu0 0.0
        %1013 = vmatpush.msra.mxu0 0.0
        %1014 = vmatpush.msra.mxu0 0.0
        %1015 = vmatpush.msra.mxu0 0.0
        %1016 = vmatpush.msra.mxu0 0.0
        %1017 = vmatpush.msra.mxu0 %v999
        %1018 = vmatpush.msra.mxu0 %v998
        %1019 = vmatpush.msra.mxu0 %v997
        %1020 = vmatpush.msra.mxu0 %v996
        %1021 = vmatmul.f32.gmra.mxu0 %v934
        %v1022 = vpop.f32.mrf.mxu0
        %v1023 = vadd.f32 %v1003, %v1022
        %1024 = vmatmul.f32.gmra.mxu0 %v937
        %v1025 = vpop.f32.mrf.mxu0
        %v1026 = vadd.f32 %v1003, %v1025
        %1027 = vdwg.mxu0
        %s1028 = scalar_lea.vmem %s812, 96
        %v1029 = vld [vmem:[%s1028] sm:$0xff]
        %v1030 = vld [vmem:[%s1028 + $0x8] sm:$0xff]
        %v1031 = vld [vmem:[%s1028 + $0x10] sm:$0xff]
        %v1032 = vld [vmem:[%s1028 + $0x18] sm:$0xff]
        %s1033 = scalar_lea.vmem %s816, 3
        %v1034 = vld [vmem:[%s1033] sm:$0x1]
        %v1036 = vperm.slane %v1034, 0
        %1038 = vmatpush.msra.mxu0 0.0
        %1039 = vmatpush.msra.mxu0 0.0
        %1040 = vmatpush.msra.mxu0 0.0
        %1041 = vmatpush.msra.mxu0 0.0
        %1042 = vmatpush.msra.mxu0 0.0
        %1043 = vmatpush.msra.mxu0 0.0
        %1044 = vmatpush.msra.mxu0 0.0
        %1045 = vmatpush.msra.mxu0 0.0
        %1046 = vmatpush.msra.mxu0 0.0
        %1047 = vmatpush.msra.mxu0 0.0
        %1048 = vmatpush.msra.mxu0 0.0
        %1049 = vmatpush.msra.mxu0 0.0
        %1050 = vmatpush.msra.mxu0 %v1032
        %1051 = vmatpush.msra.mxu0 %v1031
        %1052 = vmatpush.msra.mxu0 %v1030
        %1053 = vmatpush.msra.mxu0 %v1029
        %1054 = vmatmul.f32.gmra.mxu0 %v934
        %v1055 = vpop.f32.mrf.mxu0
        %v1056 = vadd.f32 %v1036, %v1055
        %1057 = vmatmul.f32.gmra.mxu0 %v937
        %v1058 = vpop.f32.mrf.mxu0
        %v1059 = vadd.f32 %v1036, %v1058
        %1060 = vdwg.mxu0
        %s1061 = scalar_lea.vmem %s812, 128
        %v1062 = vld [vmem:[%s1061] sm:$0xff]
        %v1063 = vld [vmem:[%s1061 + $0x8] sm:$0xff]
        %v1064 = vld [vmem:[%s1061 + $0x10] sm:$0xff]
        %v1065 = vld [vmem:[%s1061 + $0x18] sm:$0xff]
        %s1066 = scalar_lea.vmem %s816, 4
        %v1067 = vld [vmem:[%s1066] sm:$0x1]
        %v1069 = vperm.slane %v1067, 0
        %1071 = vmatpush.msra.mxu0 0.0
        %1072 = vmatpush.msra.mxu0 0.0
        %1073 = vmatpush.msra.mxu0 0.0
        %1074 = vmatpush.msra.mxu0 0.0
        %1075 = vmatpush.msra.mxu0 0.0
        %1076 = vmatpush.msra.mxu0 0.0
        %1077 = vmatpush.msra.mxu0 0.0
        %1078 = vmatpush.msra.mxu0 0.0
        %1079 = vmatpush.msra.mxu0 0.0
        %1080 = vmatpush.msra.mxu0 0.0
        %1081 = vmatpush.msra.mxu0 0.0
        %1082 = vmatpush.msra.mxu0 0.0
        %1083 = vmatpush.msra.mxu0 %v1065
        %1084 = vmatpush.msra.mxu0 %v1064
        %1085 = vmatpush.msra.mxu0 %v1063
        %1086 = vmatpush.msra.mxu0 %v1062
        %1087 = vmatmul.f32.gmra.mxu0 %v934
        %v1088 = vpop.f32.mrf.mxu0
        %v1089 = vadd.f32 %v1069, %v1088
        %1090 = vmatmul.f32.gmra.mxu0 %v937
        %v1091 = vpop.f32.mrf.mxu0
        %v1092 = vadd.f32 %v1069, %v1091
        %1093 = vdwg.mxu0
        %s1094 = scalar_lea.vmem %s812, 160
        %v1095 = vld [vmem:[%s1094] sm:$0xff]
        %v1096 = vld [vmem:[%s1094 + $0x8] sm:$0xff]
        %v1097 = vld [vmem:[%s1094 + $0x10] sm:$0xff]
        %v1098 = vld [vmem:[%s1094 + $0x18] sm:$0xff]
        %s1099 = scalar_lea.vmem %s816, 5
        %v1100 = vld [vmem:[%s1099] sm:$0x1]
        %v1102 = vperm.slane %v1100, 0
        %1104 = vmatpush.msra.mxu0 0.0
        %1105 = vmatpush.msra.mxu0 0.0
        %1106 = vmatpush.msra.mxu0 0.0
        %1107 = vmatpush.msra.mxu0 0.0
        %1108 = vmatpush.msra.mxu0 0.0
        %1109 = vmatpush.msra.mxu0 0.0
        %1110 = vmatpush.msra.mxu0 0.0
        %1111 = vmatpush.msra.mxu0 0.0
        %1112 = vmatpush.msra.mxu0 0.0
        %1113 = vmatpush.msra.mxu0 0.0
        %1114 = vmatpush.msra.mxu0 0.0
        %1115 = vmatpush.msra.mxu0 0.0
        %1116 = vmatpush.msra.mxu0 %v1098
        %1117 = vmatpush.msra.mxu0 %v1097
        %1118 = vmatpush.msra.mxu0 %v1096
        %1119 = vmatpush.msra.mxu0 %v1095
        %1120 = vmatmul.f32.gmra.mxu0 %v934
        %v1121 = vpop.f32.mrf.mxu0
        %v1122 = vadd.f32 %v1102, %v1121
        %1123 = vmatmul.f32.gmra.mxu0 %v937
        %v1124 = vpop.f32.mrf.mxu0
        %v1125 = vadd.f32 %v1102, %v1124
        %1126 = vdwg.mxu0
        %s1127 = scalar_lea.vmem %s812, 192
        %v1128 = vld [vmem:[%s1127] sm:$0xff]
        %v1129 = vld [vmem:[%s1127 + $0x8] sm:$0xff]
        %v1130 = vld [vmem:[%s1127 + $0x10] sm:$0xff]
        %v1131 = vld [vmem:[%s1127 + $0x18] sm:$0xff]
        %s1132 = scalar_lea.vmem %s816, 6
        %v1133 = vld [vmem:[%s1132] sm:$0x1]
        %v1135 = vperm.slane %v1133, 0
        %1137 = vmatpush.msra.mxu0 0.0
        %1138 = vmatpush.msra.mxu0 0.0
        %1139 = vmatpush.msra.mxu0 0.0
        %1140 = vmatpush.msra.mxu0 0.0
        %1141 = vmatpush.msra.mxu0 0.0
        %1142 = vmatpush.msra.mxu0 0.0
        %1143 = vmatpush.msra.mxu0 0.0
        %1144 = vmatpush.msra.mxu0 0.0
        %1145 = vmatpush.msra.mxu0 0.0
        %1146 = vmatpush.msra.mxu0 0.0
        %1147 = vmatpush.msra.mxu0 0.0
        %1148 = vmatpush.msra.mxu0 0.0
        %1149 = vmatpush.msra.mxu0 %v1131
        %1150 = vmatpush.msra.mxu0 %v1130
        %1151 = vmatpush.msra.mxu0 %v1129
        %1152 = vmatpush.msra.mxu0 %v1128
        %1153 = vmatmul.f32.gmra.mxu0 %v934
        %v1154 = vpop.f32.mrf.mxu0
        %v1155 = vadd.f32 %v1135, %v1154
        %1156 = vmatmul.f32.gmra.mxu0 %v937
        %v1157 = vpop.f32.mrf.mxu0
        %v1158 = vadd.f32 %v1135, %v1157
        %1159 = vdwg.mxu0
        %s1160 = scalar_lea.vmem %s812, 224
        %v1161 = vld [vmem:[%s1160] sm:$0xff]
        %v1162 = vld [vmem:[%s1160 + $0x8] sm:$0xff]
        %v1163 = vld [vmem:[%s1160 + $0x10] sm:$0xff]
        %v1164 = vld [vmem:[%s1160 + $0x18] sm:$0xff]
        %s1165 = scalar_lea.vmem %s816, 7
        %v1166 = vld [vmem:[%s1165] sm:$0x1]
        %v1168 = vperm.slane %v1166, 0
        %1170 = vmatpush.msra.mxu0 0.0
        %1171 = vmatpush.msra.mxu0 0.0
        %1172 = vmatpush.msra.mxu0 0.0
        %1173 = vmatpush.msra.mxu0 0.0
        %1174 = vmatpush.msra.mxu0 0.0
        %1175 = vmatpush.msra.mxu0 0.0
        %1176 = vmatpush.msra.mxu0 0.0
        %1177 = vmatpush.msra.mxu0 0.0
        %1178 = vmatpush.msra.mxu0 0.0
        %1179 = vmatpush.msra.mxu0 0.0
        %1180 = vmatpush.msra.mxu0 0.0
        %1181 = vmatpush.msra.mxu0 0.0
        %1182 = vmatpush.msra.mxu0 %v1164
        %1183 = vmatpush.msra.mxu0 %v1163
        %1184 = vmatpush.msra.mxu0 %v1162
        %1185 = vmatpush.msra.mxu0 %v1161
        %1186 = vmatmul.f32.gmra.mxu0 %v934
        %v1187 = vpop.f32.mrf.mxu0
        %v1188 = vadd.f32 %v1168, %v1187
        %1189 = vmatmul.f32.gmra.mxu0 %v937
        %v1190 = vpop.f32.mrf.mxu0
        %v1191 = vadd.f32 %v1168, %v1190
        %1192 = vdwg.mxu0
        %s1193 = scalar_lea.vmem %s812, 256
        %v1194 = vld [vmem:[%s1193] sm:$0xff]
        %v1195 = vld [vmem:[%s1193 + $0x8] sm:$0xff]
        %v1196 = vld [vmem:[%s1193 + $0x10] sm:$0xff]
        %v1197 = vld [vmem:[%s1193 + $0x18] sm:$0xff]
        %s1198 = scalar_lea.vmem %s816, 8
        %v1199 = vld [vmem:[%s1198] sm:$0x1]
        %v1201 = vperm.slane %v1199, 0
        %1203 = vmatpush.msra.mxu0 0.0
        %1204 = vmatpush.msra.mxu0 0.0
        %1205 = vmatpush.msra.mxu0 0.0
        %1206 = vmatpush.msra.mxu0 0.0
        %1207 = vmatpush.msra.mxu0 0.0
        %1208 = vmatpush.msra.mxu0 0.0
        %1209 = vmatpush.msra.mxu0 0.0
        %1210 = vmatpush.msra.mxu0 0.0
        %1211 = vmatpush.msra.mxu0 0.0
        %1212 = vmatpush.msra.mxu0 0.0
        %1213 = vmatpush.msra.mxu0 0.0
        %1214 = vmatpush.msra.mxu0 0.0
        %1215 = vmatpush.msra.mxu0 %v1197
        %1216 = vmatpush.msra.mxu0 %v1196
        %1217 = vmatpush.msra.mxu0 %v1195
        %1218 = vmatpush.msra.mxu0 %v1194
        %1219 = vmatmul.f32.gmra.mxu0 %v934
        %v1220 = vpop.f32.mrf.mxu0
        %v1221 = vadd.f32 %v1201, %v1220
        %1222 = vmatmul.f32.gmra.mxu0 %v937
        %v1223 = vpop.f32.mrf.mxu0
        %v1224 = vadd.f32 %v1201, %v1223
        %1225 = vdwg.mxu0
        %s1226 = scalar_lea.vmem %s812, 288
        %v1227 = vld [vmem:[%s1226] sm:$0xff]
        %v1228 = vld [vmem:[%s1226 + $0x8] sm:$0xff]
        %v1229 = vld [vmem:[%s1226 + $0x10] sm:$0xff]
        %v1230 = vld [vmem:[%s1226 + $0x18] sm:$0xff]
        %s1231 = scalar_lea.vmem %s816, 9
        %v1232 = vld [vmem:[%s1231] sm:$0x1]
        %v1234 = vperm.slane %v1232, 0
        %1236 = vmatpush.msra.mxu0 0.0
        %1237 = vmatpush.msra.mxu0 0.0
        %1238 = vmatpush.msra.mxu0 0.0
        %1239 = vmatpush.msra.mxu0 0.0
        %1240 = vmatpush.msra.mxu0 0.0
        %1241 = vmatpush.msra.mxu0 0.0
        %1242 = vmatpush.msra.mxu0 0.0
        %1243 = vmatpush.msra.mxu0 0.0
        %1244 = vmatpush.msra.mxu0 0.0
        %1245 = vmatpush.msra.mxu0 0.0
        %1246 = vmatpush.msra.mxu0 0.0
        %1247 = vmatpush.msra.mxu0 0.0
        %1248 = vmatpush.msra.mxu0 %v1230
        %1249 = vmatpush.msra.mxu0 %v1229
        %1250 = vmatpush.msra.mxu0 %v1228
        %1251 = vmatpush.msra.mxu0 %v1227
        %1252 = vmatmul.f32.gmra.mxu0 %v934
        %v1253 = vpop.f32.mrf.mxu0
        %v1254 = vadd.f32 %v1234, %v1253
        %1255 = vmatmul.f32.gmra.mxu0 %v937
        %v1256 = vpop.f32.mrf.mxu0
        %v1257 = vadd.f32 %v1234, %v1256
        %1258 = vdwg.mxu0
        %s1259 = scalar_lea.vmem %s812, 320
        %v1260 = vld [vmem:[%s1259] sm:$0xff]
        %v1261 = vld [vmem:[%s1259 + $0x8] sm:$0xff]
        %v1262 = vld [vmem:[%s1259 + $0x10] sm:$0xff]
        %v1263 = vld [vmem:[%s1259 + $0x18] sm:$0xff]
        %s1264 = scalar_lea.vmem %s816, 10
        %v1265 = vld [vmem:[%s1264] sm:$0x1]
        %v1267 = vperm.slane %v1265, 0
        %1269 = vmatpush.msra.mxu0 0.0
        %1270 = vmatpush.msra.mxu0 0.0
        %1271 = vmatpush.msra.mxu0 0.0
        %1272 = vmatpush.msra.mxu0 0.0
        %1273 = vmatpush.msra.mxu0 0.0
        %1274 = vmatpush.msra.mxu0 0.0
        %1275 = vmatpush.msra.mxu0 0.0
        %1276 = vmatpush.msra.mxu0 0.0
        %1277 = vmatpush.msra.mxu0 0.0
        %1278 = vmatpush.msra.mxu0 0.0
        %1279 = vmatpush.msra.mxu0 0.0
        %1280 = vmatpush.msra.mxu0 0.0
        %1281 = vmatpush.msra.mxu0 %v1263
        %1282 = vmatpush.msra.mxu0 %v1262
        %1283 = vmatpush.msra.mxu0 %v1261
        %1284 = vmatpush.msra.mxu0 %v1260
        %1285 = vmatmul.f32.gmra.mxu0 %v934
        %v1286 = vpop.f32.mrf.mxu0
        %v1287 = vadd.f32 %v1267, %v1286
        %1288 = vmatmul.f32.gmra.mxu0 %v937
        %v1289 = vpop.f32.mrf.mxu0
        %v1290 = vadd.f32 %v1267, %v1289
        %1291 = vdwg.mxu0
        %s1292 = scalar_lea.vmem %s812, 352
        %v1293 = vld [vmem:[%s1292] sm:$0xff]
        %v1294 = vld [vmem:[%s1292 + $0x8] sm:$0xff]
        %v1295 = vld [vmem:[%s1292 + $0x10] sm:$0xff]
        %v1296 = vld [vmem:[%s1292 + $0x18] sm:$0xff]
        %s1297 = scalar_lea.vmem %s816, 11
        %v1298 = vld [vmem:[%s1297] sm:$0x1]
        %v1300 = vperm.slane %v1298, 0
        %1302 = vmatpush.msra.mxu0 0.0
        %1303 = vmatpush.msra.mxu0 0.0
        %1304 = vmatpush.msra.mxu0 0.0
        %1305 = vmatpush.msra.mxu0 0.0
        %1306 = vmatpush.msra.mxu0 0.0
        %1307 = vmatpush.msra.mxu0 0.0
        %1308 = vmatpush.msra.mxu0 0.0
        %1309 = vmatpush.msra.mxu0 0.0
        %1310 = vmatpush.msra.mxu0 0.0
        %1311 = vmatpush.msra.mxu0 0.0
        %1312 = vmatpush.msra.mxu0 0.0
        %1313 = vmatpush.msra.mxu0 0.0
        %1314 = vmatpush.msra.mxu0 %v1296
        %1315 = vmatpush.msra.mxu0 %v1295
        %1316 = vmatpush.msra.mxu0 %v1294
        %1317 = vmatpush.msra.mxu0 %v1293
        %1318 = vmatmul.f32.gmra.mxu0 %v934
        %v1319 = vpop.f32.mrf.mxu0
        %v1320 = vadd.f32 %v1300, %v1319
        %1321 = vmatmul.f32.gmra.mxu0 %v937
        %v1322 = vpop.f32.mrf.mxu0
        %v1323 = vadd.f32 %v1300, %v1322
        %1324 = vdwg.mxu0
        %v1325 = vld [vmem:[%s2] sm:$0xff]
        %v1326 = vld [vmem:[%s2 + $0x8] sm:$0xff]
        %v1327 = vld [vmem:[%s2 + $0x10] sm:$0xff]
        %v1328 = vld [vmem:[%s2 + $0x18] sm:$0xff]
        %v1329 = vld [vmem:[%s2 + $0x20] sm:$0xff]
        %v1330 = vld [vmem:[%s2 + $0x28] sm:$0xff]
        %v1331 = vld [vmem:[%s2 + $0x30] sm:$0xff]
        %v1332 = vld [vmem:[%s2 + $0x38] sm:$0xff]
        %vm1333 = vcmask 64512
        %v1335 = vsel %vm1333, %v957, 0
        %v1338 = vsel %vm1333, %v960, 0
        %v1341 = vsel %vm1333, %v990, 0
        %v1344 = vsel %vm1333, %v993, 0
        %v1347 = vsel %vm1333, %v1023, 0
        %v1350 = vsel %vm1333, %v1026, 0
        %v1353 = vsel %vm1333, %v1056, 0
        %v1356 = vsel %vm1333, %v1059, 0
        %v1359 = vsel %vm1333, %v1089, 0
        %v1362 = vsel %vm1333, %v1092, 0
        %v1365 = vsel %vm1333, %v1122, 0
        %v1368 = vsel %vm1333, %v1125, 0
        %v1371 = vsel %vm1333, %v1155, 0
        %v1374 = vsel %vm1333, %v1158, 0
        %v1377 = vsel %vm1333, %v1188, 0
        %v1380 = vsel %vm1333, %v1191, 0
        %1382 = vmatpush.xpose.msra.mxu0 0.0
        %1383 = vmatpush.xpose.msra.mxu0 0.0
        %1384 = vmatpush.xpose.msra.mxu0 0.0
        %1385 = vmatpush.xpose.msra.mxu0 0.0
        %1386 = vmatpush.xpose.msra.mxu0 0.0
        %1387 = vmatpush.xpose.msra.mxu0 0.0
        %1388 = vmatpush.xpose.msra.mxu0 0.0
        %1389 = vmatpush.xpose.msra.mxu0 0.0
        %1390 = vmatpush.xpose.msra.mxu0 %v1380
        %1391 = vmatpush.xpose.msra.mxu0 %v1377
        %1392 = vmatpush.xpose.msra.mxu0 %v1374
        %1393 = vmatpush.xpose.msra.mxu0 %v1371
        %1394 = vmatpush.xpose.msra.mxu0 %v1368
        %1395 = vmatpush.xpose.msra.mxu0 %v1365
        %1396 = vmatpush.xpose.msra.mxu0 %v1362
        %1397 = vmatpush.xpose.msra.mxu0 %v1359
        %1398 = vmatmul.f32.gmra.mxu0 %v1335
        %v1399 = vpop.f32.mrf.mxu0
        %v1400 = vadd.f32 %v1325, %v1399
        %1401 = vmatmul.f32.gmra.mxu0 %v1338
        %v1402 = vpop.f32.mrf.mxu0
        %v1403 = vadd.f32 %v1326, %v1402
        %1404 = vmatmul.f32.gmra.mxu0 %v1341
        %v1405 = vpop.f32.mrf.mxu0
        %v1406 = vadd.f32 %v1327, %v1405
        %1407 = vmatmul.f32.gmra.mxu0 %v1344
        %v1408 = vpop.f32.mrf.mxu0
        %v1409 = vadd.f32 %v1328, %v1408
        %1410 = vmatmul.f32.gmra.mxu0 %v1347
        %v1411 = vpop.f32.mrf.mxu0
        %v1412 = vadd.f32 %v1329, %v1411
        %1413 = vmatmul.f32.gmra.mxu0 %v1350
        %v1414 = vpop.f32.mrf.mxu0
        %v1415 = vadd.f32 %v1330, %v1414
        %1416 = vmatmul.f32.gmra.mxu0 %v1353
        %v1417 = vpop.f32.mrf.mxu0
        %v1418 = vadd.f32 %v1331, %v1417
        %1419 = vmatmul.f32.gmra.mxu0 %v1356
        %v1420 = vpop.f32.mrf.mxu0
        %v1421 = vadd.f32 %v1332, %v1420
        %1422 = vdwg.mxu0
        %vm1423 = vcmask 523264
        %v1424 = vsel %vm1423, %v1400, -inf
        %1425 = vmax.xlane.f32.xlu0 %v1424
        %v1426 = vpop.xlane.xlu0 %1425
        %v1427 = vsel %vm1423, %v1403, -inf
        %1428 = vmax.xlane.f32.xlu0 %v1427
        %v1429 = vpop.xlane.xlu0 %1428
        %v1430 = vsel %vm1423, %v1406, -inf
        %1431 = vmax.xlane.f32.xlu0 %v1430
        %v1432 = vpop.xlane.xlu0 %1431
        %v1433 = vsel %vm1423, %v1409, -inf
        %1434 = vmax.xlane.f32.xlu0 %v1433
        %v1435 = vpop.xlane.xlu0 %1434
        %v1436 = vsel %vm1423, %v1412, -inf
        %1437 = vmax.xlane.f32.xlu0 %v1436
        %v1438 = vpop.xlane.xlu0 %1437
        %v1439 = vsel %vm1423, %v1415, -inf
        %1440 = vmax.xlane.f32.xlu0 %v1439
        %v1441 = vpop.xlane.xlu0 %1440
        %v1442 = vsel %vm1423, %v1418, -inf
        %1443 = vmax.xlane.f32.xlu0 %v1442
        %v1444 = vpop.xlane.xlu0 %1443
        %v1445 = vsel %vm1423, %v1421, -inf
        %1446 = vmax.xlane.f32.xlu0 %v1445
        %v1447 = vpop.xlane.xlu0 %1446
        %v1448 = vsub.f32 %v1400, %v1426
        %v1449 = vsub.f32 %v1403, %v1429
        %v1450 = vsub.f32 %v1406, %v1432
        %v1451 = vsub.f32 %v1409, %v1435
        %v1452 = vsub.f32 %v1412, %v1438
        %v1453 = vsub.f32 %v1415, %v1441
        %v1454 = vsub.f32 %v1418, %v1444
        %v1455 = vsub.f32 %v1421, %v1447
        %v1456 = vmul.f32 %v1448, 1.442695
        %v1457 = vpow.pop %v1456
        %v1458 = vmul.f32 %v1449, 1.442695
        %v1459 = vpow.pop %v1458
        %v1460 = vmul.f32 %v1450, 1.442695
        %v1461 = vpow.pop %v1460
        %v1462 = vmul.f32 %v1451, 1.442695
        %v1463 = vpow.pop %v1462
        %v1464 = vmul.f32 %v1452, 1.442695
        %v1465 = vpow.pop %v1464
        %v1466 = vmul.f32 %v1453, 1.442695
        %v1467 = vpow.pop %v1466
        %v1468 = vmul.f32 %v1454, 1.442695
        %v1469 = vpow.pop %v1468
        %v1470 = vmul.f32 %v1455, 1.442695
        %v1471 = vpow.pop %v1470
        %v1472 = vsel %vm1423, %v1457, 0.0
        %1473 = vadd.xlane.f32.xlu0 %v1472
        %v1474 = vpop.xlane.xlu0 %1473
        %v1475 = vsel %vm1423, %v1459, 0.0
        %1476 = vadd.xlane.f32.xlu0 %v1475
        %v1477 = vpop.xlane.xlu0 %1476
        %v1478 = vsel %vm1423, %v1461, 0.0
        %1479 = vadd.xlane.f32.xlu0 %v1478
        %v1480 = vpop.xlane.xlu0 %1479
        %v1481 = vsel %vm1423, %v1463, 0.0
        %1482 = vadd.xlane.f32.xlu0 %v1481
        %v1483 = vpop.xlane.xlu0 %1482
        %v1484 = vsel %vm1423, %v1465, 0.0
        %1485 = vadd.xlane.f32.xlu0 %v1484
        %v1486 = vpop.xlane.xlu0 %1485
        %v1487 = vsel %vm1423, %v1467, 0.0
        %1488 = vadd.xlane.f32.xlu0 %v1487
        %v1489 = vpop.xlane.xlu0 %1488
        %v1490 = vsel %vm1423, %v1469, 0.0
        %1491 = vadd.xlane.f32.xlu0 %v1490
        %v1492 = vpop.xlane.xlu0 %1491
        %v1493 = vsel %vm1423, %v1471, 0.0
        %1494 = vadd.xlane.f32.xlu0 %v1493
        %v1495 = vpop.xlane.xlu0 %1494
        %v1496 = vrcp.pop %v1474
        %v1497 = vrcp.pop %v1477
        %v1498 = vrcp.pop %v1480
        %v1499 = vrcp.pop %v1483
        %v1500 = vrcp.pop %v1486
        %v1501 = vrcp.pop %v1489
        %v1502 = vrcp.pop %v1492
        %v1503 = vrcp.pop %v1495
        %v1504 = vmul.f32 %v1457, %v1496
        %v1505 = vmul.f32 %v1459, %v1497
        %v1506 = vmul.f32 %v1461, %v1498
        %v1507 = vmul.f32 %v1463, %v1499
        %v1508 = vmul.f32 %v1465, %v1500
        %v1509 = vmul.f32 %v1467, %v1501
        %v1510 = vmul.f32 %v1469, %v1502
        %v1511 = vmul.f32 %v1471, %v1503
        %v1513 = vsel %vm1423, %v1504, 0
        %v1516 = vsel %vm1423, %v1505, 0
        %v1519 = vsel %vm1423, %v1506, 0
        %v1522 = vsel %vm1423, %v1507, 0
        %v1525 = vsel %vm1423, %v1508, 0
        %v1528 = vsel %vm1423, %v1509, 0
        %v1531 = vsel %vm1423, %v1510, 0
        %v1534 = vsel %vm1423, %v1511, 0
        %1536 = vmatpush.msra.mxu0 0.0
        %1537 = vmatpush.msra.mxu0 0.0
        %1538 = vmatpush.msra.mxu0 0.0
        %1539 = vmatpush.msra.mxu0 0.0
        %1540 = vmatpush.msra.mxu0 0.0
        %1541 = vmatpush.msra.mxu0 0.0
        %1542 = vmatpush.msra.mxu0 0.0
        %1543 = vmatpush.msra.mxu0 0.0
        %1544 = vmatpush.msra.mxu0 %v1323
        %1545 = vmatpush.msra.mxu0 %v1320
        %1546 = vmatpush.msra.mxu0 %v1290
        %1547 = vmatpush.msra.mxu0 %v1287
        %1548 = vmatpush.msra.mxu0 %v1257
        %1549 = vmatpush.msra.mxu0 %v1254
        %1550 = vmatpush.msra.mxu0 %v1224
        %1551 = vmatpush.msra.mxu0 %v1221
        %1552 = vmatmul.f32.gmra.mxu0 %v1513
        %v1553 = vpop.f32.mrf.mxu0
        %v1554 = vadd.f32 0.0, %v1553
        %1555 = vmatmul.f32.gmra.mxu0 %v1516
        %v1556 = vpop.f32.mrf.mxu0
        %v1557 = vadd.f32 0.0, %v1556
        %1558 = vmatmul.f32.gmra.mxu0 %v1519
        %v1559 = vpop.f32.mrf.mxu0
        %v1560 = vadd.f32 0.0, %v1559
        %1561 = vmatmul.f32.gmra.mxu0 %v1522
        %v1562 = vpop.f32.mrf.mxu0
        %v1563 = vadd.f32 0.0, %v1562
        %1564 = vmatmul.f32.gmra.mxu0 %v1525
        %v1565 = vpop.f32.mrf.mxu0
        %v1566 = vadd.f32 0.0, %v1565
        %1567 = vmatmul.f32.gmra.mxu0 %v1528
        %v1568 = vpop.f32.mrf.mxu0
        %v1569 = vadd.f32 0.0, %v1568
        %1570 = vmatmul.f32.gmra.mxu0 %v1531
        %v1571 = vpop.f32.mrf.mxu0
        %v1572 = vadd.f32 0.0, %v1571
        %1573 = vmatmul.f32.gmra.mxu0 %v1534
        %v1574 = vpop.f32.mrf.mxu0
        %v1575 = vadd.f32 0.0, %v1574
        %1576 = vdwg.mxu0
        %v1577 = vld [vmem:[%s3] sm:$0xff]
        %v1578 = vld [vmem:[%s3 + $0x8] sm:$0xff]
        %v1579 = vld [vmem:[%s3 + $0x10] sm:$0xff]
        %v1580 = vld [vmem:[%s3 + $0x18] sm:$0xff]
        %v1581 = vld [vmem:[%s3 + $0x20] sm:$0xff]
        %v1582 = vld [vmem:[%s3 + $0x28] sm:$0xff]
        %v1583 = vld [vmem:[%s3 + $0x30] sm:$0xff]
        %v1584 = vld [vmem:[%s3 + $0x38] sm:$0xff]
        %v1586 = vsel %vm1423, %v1577, 0
        %v1589 = vsel %vm1423, %v1578, 0
        %v1592 = vsel %vm1423, %v1579, 0
        %v1595 = vsel %vm1423, %v1580, 0
        %v1598 = vsel %vm1423, %v1581, 0
        %v1601 = vsel %vm1423, %v1582, 0
        %v1604 = vsel %vm1423, %v1583, 0
        %v1607 = vsel %vm1423, %v1584, 0
        %1609 = vmatpush.msra.mxu0 0.0
        %1610 = vmatpush.msra.mxu0 0.0
        %1611 = vmatpush.msra.mxu0 0.0
        %1612 = vmatpush.msra.mxu0 0.0
        %1613 = vmatpush.msra.mxu0 0.0
        %1614 = vmatpush.msra.mxu0 0.0
        %1615 = vmatpush.msra.mxu0 0.0
        %1616 = vmatpush.msra.mxu0 0.0
        %1617 = vmatpush.msra.mxu0 %v1575
        %1618 = vmatpush.msra.mxu0 %v1572
        %1619 = vmatpush.msra.mxu0 %v1569
        %1620 = vmatpush.msra.mxu0 %v1566
        %1621 = vmatpush.msra.mxu0 %v1563
        %1622 = vmatpush.msra.mxu0 %v1560
        %1623 = vmatpush.msra.mxu0 %v1557
        %1624 = vmatpush.msra.mxu0 %v1554
        %1625 = vmatmul.f32.gmra.mxu0 %v1586
        %v1626 = vpop.f32.mrf.mxu0
        %v1627 = vadd.f32 0.0, %v1626
        %1628 = vmatmul.f32.gmra.mxu0 %v1589
        %v1629 = vpop.f32.mrf.mxu0
        %v1630 = vadd.f32 0.0, %v1629
        %1631 = vmatmul.f32.gmra.mxu0 %v1592
        %v1632 = vpop.f32.mrf.mxu0
        %v1633 = vadd.f32 0.0, %v1632
        %1634 = vmatmul.f32.gmra.mxu0 %v1595
        %v1635 = vpop.f32.mrf.mxu0
        %v1636 = vadd.f32 0.0, %v1635
        %1637 = vmatmul.f32.gmra.mxu0 %v1598
        %v1638 = vpop.f32.mrf.mxu0
        %v1639 = vadd.f32 0.0, %v1638
        %1640 = vmatmul.f32.gmra.mxu0 %v1601
        %v1641 = vpop.f32.mrf.mxu0
        %v1642 = vadd.f32 0.0, %v1641
        %1643 = vmatmul.f32.gmra.mxu0 %v1604
        %v1644 = vpop.f32.mrf.mxu0
        %v1645 = vadd.f32 0.0, %v1644
        %1646 = vmatmul.f32.gmra.mxu0 %v1607
        %v1647 = vpop.f32.mrf.mxu0
        %v1648 = vadd.f32 0.0, %v1647
        %1649 = vdwg.mxu0
        %v1650 = vld [vmem:[%s824] sm:$0x1]
        %v1651 = vld [vmem:[%s821] sm:$0xff]
        %v1653 = vsel %vm1333, %v1627, 0
        %v1656 = vsel %vm1333, %v1630, 0
        %1658 = vmatpush.msra.mxu0 0.0
        %1659 = vmatpush.msra.mxu0 0.0
        %1660 = vmatpush.msra.mxu0 0.0
        %1661 = vmatpush.msra.mxu0 0.0
        %1662 = vmatpush.msra.mxu0 0.0
        %1663 = vmatpush.msra.mxu0 0.0
        %1664 = vmatpush.msra.mxu0 0.0
        %1665 = vmatpush.msra.mxu0 0.0
        %1666 = vmatpush.msra.mxu0 0.0
        %1667 = vmatpush.msra.mxu0 0.0
        %1668 = vmatpush.msra.mxu0 0.0
        %1669 = vmatpush.msra.mxu0 0.0
        %1670 = vmatpush.msra.mxu0 0.0
        %1671 = vmatpush.msra.mxu0 0.0
        %1672 = vmatpush.msra.mxu0 0.0
        %1673 = vmatpush.msra.mxu0 %v1651
        %1674 = vmatmul.f32.gmra.mxu0 %v1653
        %v1675 = vpop.f32.mrf.mxu0
        %v1676 = vadd.f32 0.0, %v1675
        %1677 = vmatmul.f32.gmra.mxu0 %v1656
        %v1678 = vpop.f32.mrf.mxu0
        %v1679 = vadd.f32 0.0, %v1678
        %1680 = vdwg.mxu0
        %v1682 = vperm.slane %v1650, 0
        %v1684 = vadd.f32 %v1682, %v1676
        %v1685 = vadd.f32 %v1682, %v1679
        %s1686 = scalar_lea.vmem %s821, 8
        %v1687 = vld [vmem:[%s1686] sm:$0xff]
        %v1689 = vsel %vm1333, %v1633, 0
        %v1692 = vsel %vm1333, %v1636, 0
        %1694 = vmatpush.msra.mxu0 0.0
        %1695 = vmatpush.msra.mxu0 0.0
        %1696 = vmatpush.msra.mxu0 0.0
        %1697 = vmatpush.msra.mxu0 0.0
        %1698 = vmatpush.msra.mxu0 0.0
        %1699 = vmatpush.msra.mxu0 0.0
        %1700 = vmatpush.msra.mxu0 0.0
        %1701 = vmatpush.msra.mxu0 0.0
        %1702 = vmatpush.msra.mxu0 0.0
        %1703 = vmatpush.msra.mxu0 0.0
        %1704 = vmatpush.msra.mxu0 0.0
        %1705 = vmatpush.msra.mxu0 0.0
        %1706 = vmatpush.msra.mxu0 0.0
        %1707 = vmatpush.msra.mxu0 0.0
        %1708 = vmatpush.msra.mxu0 0.0
        %1709 = vmatpush.msra.mxu0 %v1687
        %1710 = vmatmul.f32.gmra.mxu0 %v1689
        %v1711 = vpop.f32.mrf.mxu0
        %v1712 = vadd.f32 0.0, %v1711
        %1713 = vmatmul.f32.gmra.mxu0 %v1692
        %v1714 = vpop.f32.mrf.mxu0
        %v1715 = vadd.f32 0.0, %v1714
        %1716 = vdwg.mxu0
        %v1717 = vadd.f32 %v1684, %v1712
        %v1718 = vadd.f32 %v1685, %v1715
        %s1719 = scalar_lea.vmem %s821, 16
        %v1720 = vld [vmem:[%s1719] sm:$0xff]
        %v1722 = vsel %vm1333, %v1639, 0
        %v1725 = vsel %vm1333, %v1642, 0
        %1727 = vmatpush.msra.mxu0 0.0
        %1728 = vmatpush.msra.mxu0 0.0
        %1729 = vmatpush.msra.mxu0 0.0
        %1730 = vmatpush.msra.mxu0 0.0
        %1731 = vmatpush.msra.mxu0 0.0
        %1732 = vmatpush.msra.mxu0 0.0
        %1733 = vmatpush.msra.mxu0 0.0
        %1734 = vmatpush.msra.mxu0 0.0
        %1735 = vmatpush.msra.mxu0 0.0
        %1736 = vmatpush.msra.mxu0 0.0
        %1737 = vmatpush.msra.mxu0 0.0
        %1738 = vmatpush.msra.mxu0 0.0
        %1739 = vmatpush.msra.mxu0 0.0
        %1740 = vmatpush.msra.mxu0 0.0
        %1741 = vmatpush.msra.mxu0 0.0
        %1742 = vmatpush.msra.mxu0 %v1720
        %1743 = vmatmul.f32.gmra.mxu0 %v1722
        %v1744 = vpop.f32.mrf.mxu0
        %v1745 = vadd.f32 0.0, %v1744
        %1746 = vmatmul.f32.gmra.mxu0 %v1725
        %v1747 = vpop.f32.mrf.mxu0
        %v1748 = vadd.f32 0.0, %v1747
        %1749 = vdwg.mxu0
        %v1750 = vadd.f32 %v1717, %v1745
        %v1751 = vadd.f32 %v1718, %v1748
        %s1752 = scalar_lea.vmem %s821, 24
        %v1753 = vld [vmem:[%s1752] sm:$0xff]
        %v1755 = vsel %vm1333, %v1645, 0
        %v1758 = vsel %vm1333, %v1648, 0
        %1760 = vmatpush.msra.mxu0 0.0
        %1761 = vmatpush.msra.mxu0 0.0
        %1762 = vmatpush.msra.mxu0 0.0
        %1763 = vmatpush.msra.mxu0 0.0
        %1764 = vmatpush.msra.mxu0 0.0
        %1765 = vmatpush.msra.mxu0 0.0
        %1766 = vmatpush.msra.mxu0 0.0
        %1767 = vmatpush.msra.mxu0 0.0
        %1768 = vmatpush.msra.mxu0 0.0
        %1769 = vmatpush.msra.mxu0 0.0
        %1770 = vmatpush.msra.mxu0 0.0
        %1771 = vmatpush.msra.mxu0 0.0
        %1772 = vmatpush.msra.mxu0 0.0
        %1773 = vmatpush.msra.mxu0 0.0
        %1774 = vmatpush.msra.mxu0 0.0
        %1775 = vmatpush.msra.mxu0 %v1753
        %1776 = vmatmul.f32.gmra.mxu0 %v1755
        %v1777 = vpop.f32.mrf.mxu0
        %v1778 = vadd.f32 0.0, %v1777
        %1779 = vmatmul.f32.gmra.mxu0 %v1758
        %v1780 = vpop.f32.mrf.mxu0
        %v1781 = vadd.f32 0.0, %v1780
        %1782 = vdwg.mxu0
        %v1783 = vadd.f32 %v1750, %v1778
        %v1784 = vadd.f32 %v1751, %v1781
        %v1785 = vadd.f32 %v859, %v1783
        %v1786 = vadd.f32 %v860, %v1784
        %v1787 = vld [vmem:[%s827] sm:$0x1]
        %v1788 = vld [vmem:[%s830] sm:$0x1]
        %v1789 = vsel %vm863, %v1785, 0.0
        %1790 = vadd.xlane.f32.xlu0 %v1789
        %v1791 = vpop.xlane.xlu0 %1790
        %v1792 = vsel %vm863, %v1786, 0.0
        %1793 = vadd.xlane.f32.xlu0 %v1792
        %v1794 = vpop.xlane.xlu0 %1793
        %v1795 = vmul.f32 %v1791, %v876
        %v1796 = vmul.f32 %v1794, %v876
        %v1797 = vsub.f32 %v1785, %v1795
        %v1798 = vsub.f32 %v1786, %v1796
        %v1799 = vmul.f32 %v1797, %v1797
        %v1800 = vmul.f32 %v1798, %v1798
        %v1801 = vsel %vm863, %v1799, 0.0
        %1802 = vadd.xlane.f32.xlu0 %v1801
        %v1803 = vpop.xlane.xlu0 %1802
        %v1804 = vsel %vm863, %v1800, 0.0
        %1805 = vadd.xlane.f32.xlu0 %v1804
        %v1806 = vpop.xlane.xlu0 %1805
        %v1807 = vmul.f32 %v1803, %v876
        %v1808 = vmul.f32 %v1806, %v876
        %v1809 = vadd.f32 %v1807, 1e-05
        %v1810 = vadd.f32 %v1808, 1e-05
        %v1811 = vrsqrt.pop %v1809
        %v1812 = vmul.f32 %v1811, %v1809
        %v1813 = vmul.f32 %v1812, %v1811
        %v1814 = vmul.f32 0.5, %v1813
        %v1815 = vsub.f32 1.5, %v1814
        %v1816 = vmul.f32 %v1811, %v1815
        %vm1817 = vweird.f32 %v1809
        %vm1818 = vweird.f32 %v1811
        %vm1819 = vmor %vm1817, %vm1818
        %v1820 = vsel %vm1819, %v1811, %v1816
        %v1821 = vrsqrt.pop %v1810
        %v1822 = vmul.f32 %v1821, %v1810
        %v1823 = vmul.f32 %v1822, %v1821
        %v1824 = vmul.f32 0.5, %v1823
        %v1825 = vsub.f32 1.5, %v1824
        %v1826 = vmul.f32 %v1821, %v1825
        %vm1827 = vweird.f32 %v1810
        %vm1828 = vweird.f32 %v1821
        %vm1829 = vmor %vm1827, %vm1828
        %v1830 = vsel %vm1829, %v1821, %v1826
        %v1831 = vmul.f32 %v1797, %v1820
        %v1832 = vmul.f32 %v1798, %v1830
        %v1834 = vperm.slane %v1787, 0
        %v1836 = vmul.f32 %v1831, %v1834
        %v1837 = vmul.f32 %v1832, %v1834
        %v1839 = vperm.slane %v1788, 0
        %v1841 = vadd.f32 %v1836, %v1839
        %v1842 = vadd.f32 %v1837, %v1839
        %v1843 = vld [vmem:[%s835] sm:$0xff]
        %v1844 = vld [vmem:[%s835 + $0x8] sm:$0xff]
        %v1845 = vld [vmem:[%s835 + $0x10] sm:$0xff]
        %v1846 = vld [vmem:[%s835 + $0x18] sm:$0xff]
        %v1847 = vld [vmem:[%s838] sm:$0x1]
        %v1849 = vperm.slane %v1847, 0
        %v1852 = vsel %vm863, %v1841, 0
        %v1855 = vsel %vm863, %v1842, 0
        %1857 = vmatpush.msra.mxu0 0.0
        %1858 = vmatpush.msra.mxu0 0.0
        %1859 = vmatpush.msra.mxu0 0.0
        %1860 = vmatpush.msra.mxu0 0.0
        %1861 = vmatpush.msra.mxu0 0.0
        %1862 = vmatpush.msra.mxu0 0.0
        %1863 = vmatpush.msra.mxu0 0.0
        %1864 = vmatpush.msra.mxu0 0.0
        %1865 = vmatpush.msra.mxu0 0.0
        %1866 = vmatpush.msra.mxu0 0.0
        %1867 = vmatpush.msra.mxu0 0.0
        %1868 = vmatpush.msra.mxu0 0.0
        %1869 = vmatpush.msra.mxu0 %v1846
        %1870 = vmatpush.msra.mxu0 %v1845
        %1871 = vmatpush.msra.mxu0 %v1844
        %1872 = vmatpush.msra.mxu0 %v1843
        %1873 = vmatmul.f32.gmra.mxu0 %v1852
        %v1874 = vpop.f32.mrf.mxu0
        %v1875 = vadd.f32 %v1849, %v1874
        %1876 = vmatmul.f32.gmra.mxu0 %v1855
        %v1877 = vpop.f32.mrf.mxu0
        %v1878 = vadd.f32 %v1849, %v1877
        %1879 = vdwg.mxu0
        %v1880 = vmul.f32 %v1875, 0.5
        %v1881 = vmul.f32 %v1878, 0.5
        %v1882 = vmul.f32 %v1875, 0.70710677
        %v1883 = vmul.f32 %v1878, 0.70710677
        %v1884 = vmul.f32 %v1882, %v1882
        %v1885 = vmin.f32 16.0, %v1884
        %v1886 = vmul.f32 %v1885, 2.1237322e-06
        %v1887 = vadd.f32 %v1886, 0.00028619796
        %v1888 = vmul.f32 %v1885, %v1887
        %v1889 = vadd.f32 %v1888, 0.0036580483
        %v1890 = vmul.f32 %v1885, %v1889
        %v1891 = vadd.f32 %v1890, 0.05243302
        %v1892 = vmul.f32 %v1885, %v1891
        %v1893 = vadd.f32 %v1892, 0.18741608
        %v1894 = vmul.f32 %v1885, %v1893
        %v1895 = vadd.f32 %v1894, 1.1283791
        %v1896 = vmul.f32 %v1882, %v1895
        %v1897 = vmul.f32 %v1885, 3.8918573e-05
        %v1898 = vadd.f32 %v1897, 0.001143296
        %v1899 = vmul.f32 %v1885, %v1898
        %v1900 = vadd.f32 %v1899, 0.014752088
        %v1901 = vmul.f32 %v1885, %v1900
        %v1902 = vadd.f32 %v1901, 0.112945676
        %v1903 = vmul.f32 %v1885, %v1902
        %v1904 = vadd.f32 %v1903, 0.4994258
        %v1905 = vmul.f32 %v1885, %v1904
        %v1906 = vadd.f32 %v1905, 1.0
        %v1907 = vrcp.pop %v1906
        %v1908 = vmul.f32 %v1906, %v1907
        %v1909 = vsub.f32 1.0, %v1908
        %v1910 = vmul.f32 %v1907, %v1909
        %v1911 = vadd.f32 %v1907, %v1910
        %vm1912 = vweird.f32 %v1906
        %vm1913 = vweird.f32 %v1907
        %vm1914 = vmor %vm1912, %vm1913
        %v1915 = vsel %vm1914, %v1907, %v1911
        %v1916 = vand.u32 2147483647, %v1906
        %vm1917 = vcmp.eq.f32.partialorder %v1916, 8.507059e+37
        %v1918 = vand.u32 %v1906, 2147483648
        %v1919 = vor.u32 1.1754944e-38, %v1918
        %v1920 = vsel %vm1917, %v1919, %v1915
        %v1921 = vmul.f32 %v1896, %v1920
        %v1922 = vmin.f32 %v1921, 1.0
        %v1923 = vmax.f32 %v1922, -1.0
        %v1924 = vmul.f32 %v1883, %v1883
        %v1925 = vmin.f32 16.0, %v1924
        %v1926 = vmul.f32 %v1925, 2.1237322e-06
        %v1927 = vadd.f32 %v1926, 0.00028619796
        %v1928 = vmul.f32 %v1925, %v1927
        %v1929 = vadd.f32 %v1928, 0.0036580483
        %v1930 = vmul.f32 %v1925, %v1929
        %v1931 = vadd.f32 %v1930, 0.05243302
        %v1932 = vmul.f32 %v1925, %v1931
        %v1933 = vadd.f32 %v1932, 0.18741608
        %v1934 = vmul.f32 %v1925, %v1933
        %v1935 = vadd.f32 %v1934, 1.1283791
        %v1936 = vmul.f32 %v1883, %v1935
        %v1937 = vmul.f32 %v1925, 3.8918573e-05
        %v1938 = vadd.f32 %v1937, 0.001143296
        %v1939 = vmul.f32 %v1925, %v1938
        %v1940 = vadd.f32 %v1939, 0.014752088
        %v1941 = vmul.f32 %v1925, %v1940
        %v1942 = vadd.f32 %v1941, 0.112945676
        %v1943 = vmul.f32 %v1925, %v1942
        %v1944 = vadd.f32 %v1943, 0.4994258
        %v1945 = vmul.f32 %v1925, %v1944
        %v1946 = vadd.f32 %v1945, 1.0
        %v1947 = vrcp.pop %v1946
        %v1948 = vmul.f32 %v1946, %v1947
        %v1949 = vsub.f32 1.0, %v1948
        %v1950 = vmul.f32 %v1947, %v1949
        %v1951 = vadd.f32 %v1947, %v1950
        %vm1952 = vweird.f32 %v1946
        %vm1953 = vweird.f32 %v1947
        %vm1954 = vmor %vm1952, %vm1953
        %v1955 = vsel %vm1954, %v1947, %v1951
        %v1956 = vand.u32 2147483647, %v1946
        %vm1957 = vcmp.eq.f32.partialorder %v1956, 8.507059e+37
        %v1958 = vand.u32 %v1946, 2147483648
        %v1959 = vor.u32 1.1754944e-38, %v1958
        %v1960 = vsel %vm1957, %v1959, %v1955
        %v1961 = vmul.f32 %v1936, %v1960
        %v1962 = vmin.f32 %v1961, 1.0
        %v1963 = vmax.f32 %v1962, -1.0
        %v1964 = vadd.f32 %v1923, 1.0
        %v1965 = vadd.f32 %v1963, 1.0
        %v1966 = vmul.f32 %v1880, %v1964
        %v1967 = vmul.f32 %v1881, %v1965
        %v1968 = vld [vmem:[%s843] sm:$0xff]
        %v1969 = vld [vmem:[%s843 + $0x8] sm:$0xff]
        %v1970 = vld [vmem:[%s843 + $0x10] sm:$0xff]
        %v1971 = vld [vmem:[%s843 + $0x18] sm:$0xff]
        %v1972 = vld [vmem:[%s843 + $0x20] sm:$0xff]
        %v1973 = vld [vmem:[%s843 + $0x28] sm:$0xff]
        %v1974 = vld [vmem:[%s843 + $0x30] sm:$0xff]
        %v1975 = vld [vmem:[%s843 + $0x38] sm:$0xff]
        %v1976 = vld [vmem:[%s843 + $0x40] sm:$0xff]
        %v1977 = vld [vmem:[%s843 + $0x48] sm:$0xff]
        %v1978 = vld [vmem:[%s843 + $0x50] sm:$0xff]
        %v1979 = vld [vmem:[%s843 + $0x58] sm:$0xff]
        %v1980 = vld [vmem:[%s846] sm:$0x1]
        %v1982 = vperm.slane %v1980, 0
        %vm1984 = vcmask 785408
        %v1986 = vsel %vm1984, %v1966, 0
        %v1989 = vsel %vm1984, %v1967, 0
        %1991 = vmatpush.msra.mxu0 0.0
        %1992 = vmatpush.msra.mxu0 0.0
        %1993 = vmatpush.msra.mxu0 0.0
        %1994 = vmatpush.msra.mxu0 0.0
        %1995 = vmatpush.msra.mxu0 %v1979
        %1996 = vmatpush.msra.mxu0 %v1978
        %1997 = vmatpush.msra.mxu0 %v1977
        %1998 = vmatpush.msra.mxu0 %v1976
        %1999 = vmatpush.msra.mxu0 %v1975
        %2000 = vmatpush.msra.mxu0 %v1974
        %2001 = vmatpush.msra.mxu0 %v1973
        %2002 = vmatpush.msra.mxu0 %v1972
        %2003 = vmatpush.msra.mxu0 %v1971
        %2004 = vmatpush.msra.mxu0 %v1970
        %2005 = vmatpush.msra.mxu0 %v1969
        %2006 = vmatpush.msra.mxu0 %v1968
        %2007 = vmatmul.f32.gmra.mxu0 %v1986
        %v2008 = vpop.f32.mrf.mxu0
        %v2009 = vadd.f32 %v1982, %v2008
        %2010 = vmatmul.f32.gmra.mxu0 %v1989
        %v2011 = vpop.f32.mrf.mxu0
        %v2012 = vadd.f32 %v1982, %v2011
        %2013 = vdwg.mxu0
        %v2014 = vadd.f32 %v1841, %v2009
        %v2015 = vadd.f32 %v1842, %v2012
        %2016 = vst.msk [vmem:[#allocation2] sm:$0xff] %vm863, %v2014
        %2017 = vst.msk [vmem:[#allocation2 + $0x8] sm:$0xff] %vm863, %v2015
        %p2018 = scmp.eq.s32.totalorder %s36, 1
        // Predicated region
        $region113: #{transformer_classifier.1} parent=107 // pred_check
          %p2019 = pneg %p2018
        $region114: #{transformer_classifier.1} parent=107 // pred_check_branch
          %2021 = sbr.rel (%p2019) target = $region116
        $region115: #{transformer_classifier.1} parent=107 // pred_region
          %v2022 = vld [vmem:[%s16] sm:$0x1]
          %v2023 = vld [vmem:[%s17] sm:$0x1]
          %v2024 = vsel %vm863, %v2014, 0.0
          %2025 = vadd.xlane.f32.xlu0 %v2024
          %v2026 = vpop.xlane.xlu0 %2025
          %v2027 = vsel %vm863, %v2015, 0.0
          %2028 = vadd.xlane.f32.xlu0 %v2027
          %v2029 = vpop.xlane.xlu0 %2028
          %v2030 = vmul.f32 %v2026, %v876
          %v2031 = vmul.f32 %v2029, %v876
          %v2032 = vsub.f32 %v2014, %v2030
          %v2033 = vsub.f32 %v2015, %v2031
          %v2034 = vmul.f32 %v2032, %v2032
          %v2035 = vmul.f32 %v2033, %v2033
          %v2036 = vsel %vm863, %v2034, 0.0
          %2037 = vadd.xlane.f32.xlu0 %v2036
          %v2038 = vpop.xlane.xlu0 %2037
          %v2039 = vsel %vm863, %v2035, 0.0
          %2040 = vadd.xlane.f32.xlu0 %v2039
          %v2041 = vpop.xlane.xlu0 %2040
          %v2042 = vmul.f32 %v2038, %v876
          %v2043 = vmul.f32 %v2041, %v876
          %v2044 = vadd.f32 %v2042, 1e-05
          %v2045 = vadd.f32 %v2043, 1e-05
          %v2046 = vrsqrt.pop %v2044
          %v2047 = vmul.f32 %v2046, %v2044
          %v2048 = vmul.f32 %v2047, %v2046
          %v2049 = vmul.f32 0.5, %v2048
          %v2050 = vsub.f32 1.5, %v2049
          %v2051 = vmul.f32 %v2046, %v2050
          %vm2052 = vweird.f32 %v2044
          %vm2053 = vweird.f32 %v2046
          %vm2054 = vmor %vm2052, %vm2053
          %v2055 = vsel %vm2054, %v2046, %v2051
          %v2056 = vrsqrt.pop %v2045
          %v2057 = vmul.f32 %v2056, %v2045
          %v2058 = vmul.f32 %v2057, %v2056
          %v2059 = vmul.f32 0.5, %v2058
          %v2060 = vsub.f32 1.5, %v2059
          %v2061 = vmul.f32 %v2056, %v2060
          %vm2062 = vweird.f32 %v2045
          %vm2063 = vweird.f32 %v2056
          %vm2064 = vmor %vm2062, %vm2063
          %v2065 = vsel %vm2064, %v2056, %v2061
          %v2066 = vmul.f32 %v2032, %v2055
          %v2067 = vmul.f32 %v2033, %v2065
          %v2069 = vperm.slane %v2022, 0
          %v2071 = vmul.f32 %v2066, %v2069
          %v2072 = vmul.f32 %v2067, %v2069
          %v2074 = vperm.slane %v2023, 0
          %v2076 = vadd.f32 %v2071, %v2074
          %v2077 = vadd.f32 %v2072, %v2074
          %v2078 = vld [vmem:[%s18] sm:$0x1]
          %v2080 = vperm.slane %v2078, 0
          %v2082 = vmul.f32 %v2076, %v2080
          %v2083 = vmul.f32 %v2077, %v2080
          %v2084 = vsel %vm863, %v2082, 0.0
          %2085 = vadd.xlane.f32.xlu0 %v2084
          %v2086 = vpop.xlane.xlu0 %2085
          %v2087 = vsel %vm863, %v2083, 0.0
          %2088 = vadd.xlane.f32.xlu0 %v2087
          %v2089 = vpop.xlane.xlu0 %2088
          %v2090 = vld [vmem:[#allocation3] sm:$0x1]
          %v2092 = vperm.slane %v2090, 0
          %v2094 = vadd.f32 %v2086, %v2092
          %v2095 = vadd.f32 %v2089, %v2092
          %vm2096 = vcmask 7168
          %v2097 = vsel %vm2096, %v2094, -inf
          %v2098 = vrot.slane %v2097, 4
          %v2099 = vmax.f32 %v2097, %v2098
          %v2100 = vrot.slane %v2099, 2
          %v2101 = vmax.f32 %v2099, %v2100
          %v2102 = vrot.slane %v2101, 1
          %v2103 = vmax.f32 %v2101, %v2102
          %v2104 = vsub.f32 %v2094, %v2103
          %v2105 = vmul.f32 %v2104, 1.442695
          %v2106 = vpow.pop %v2105
          %v2107 = vsel %vm2096, %v2106, 0.0
          %v2108 = vrot.slane %v2107, 4
          %v2109 = vadd.f32 %v2107, %v2108
          %v2110 = vrot.slane %v2109, 2
          %v2111 = vadd.f32 %v2109, %v2110
          %v2112 = vrot.slane %v2111, 1
          %v2113 = vadd.f32 %v2111, %v2112
          %v2114 = vrcp.pop %v2113
          %v2115 = vmul.f32 %v2106, %v2114
          %2117 = vset.pattern.permute.xlu0 0
          %2118 = vperm.xlu0 %2117, %v2115
          %v2119 = vpop.permute.xlu0 %2118
          %v2121 = vmul.f32 %v2119, %v2076
          %v2122 = vsel %vm863, %v2121, 0.0
          %v2123 = vrot.slane %v2122, 4
          %v2124 = vadd.f32 %v2122, %v2123
          %v2125 = vrot.slane %v2124, 2
          %v2126 = vadd.f32 %v2124, %v2125
          %v2127 = vrot.slane %v2126, 1
          %v2128 = vadd.f32 %v2126, %v2127
          %v2129 = vsel %vm2096, %v2095, -inf
          %v2130 = vrot.slane %v2129, 4
          %v2131 = vmax.f32 %v2129, %v2130
          %v2132 = vrot.slane %v2131, 2
          %v2133 = vmax.f32 %v2131, %v2132
          %v2134 = vrot.slane %v2133, 1
          %v2135 = vmax.f32 %v2133, %v2134
          %v2136 = vsub.f32 %v2095, %v2135
          %v2137 = vmul.f32 %v2136, 1.442695
          %v2138 = vpow.pop %v2137
          %v2139 = vsel %vm2096, %v2138, 0.0
          %v2140 = vrot.slane %v2139, 4
          %v2141 = vadd.f32 %v2139, %v2140
          %v2142 = vrot.slane %v2141, 2
          %v2143 = vadd.f32 %v2141, %v2142
          %v2144 = vrot.slane %v2143, 1
          %v2145 = vadd.f32 %v2143, %v2144
          %v2146 = vrcp.pop %v2145
          %v2147 = vmul.f32 %v2138, %v2146
          %2149 = vset.pattern.permute.xlu0 0
          %2150 = vperm.xlu0 %2149, %v2147
          %v2151 = vpop.permute.xlu0 %2150
          %v2153 = vmul.f32 %v2151, %v2077
          %v2154 = vsel %vm863, %v2153, 0.0
          %v2155 = vrot.slane %v2154, 4
          %v2156 = vadd.f32 %v2154, %v2155
          %v2157 = vrot.slane %v2156, 2
          %v2158 = vadd.f32 %v2156, %v2157
          %v2159 = vrot.slane %v2158, 1
          %v2160 = vadd.f32 %v2158, %v2159
          %vm2161 = vcmask 1040384
          %v2162 = vsel %vm2161, %v2128, %v2160
          %v2163 = vld [vmem:[%s20] sm:$0xff]
          %v2164 = vld [vmem:[%s20 + $0x8] sm:$0xff]
          %v2165 = vld [vmem:[%s20 + $0x10] sm:$0xff]
          %v2166 = vld [vmem:[%s20 + $0x18] sm:$0xff]
          %v2167 = vld [vmem:[%s21] sm:$0x1]
          %v2169 = vperm.slane %v2167, 0
          %v2172 = vsel %vm863, %v2162, 0
          %2174 = vmatpush.msra.mxu0 0.0
          %2175 = vmatpush.msra.mxu0 0.0
          %2176 = vmatpush.msra.mxu0 0.0
          %2177 = vmatpush.msra.mxu0 0.0
          %2178 = vmatpush.msra.mxu0 0.0
          %2179 = vmatpush.msra.mxu0 0.0
          %2180 = vmatpush.msra.mxu0 0.0
          %2181 = vmatpush.msra.mxu0 0.0
          %2182 = vmatpush.msra.mxu0 0.0
          %2183 = vmatpush.msra.mxu0 0.0
          %2184 = vmatpush.msra.mxu0 0.0
          %2185 = vmatpush.msra.mxu0 0.0
          %2186 = vmatpush.msra.mxu0 %v2166
          %2187 = vmatpush.msra.mxu0 %v2165
          %2188 = vmatpush.msra.mxu0 %v2164
          %2189 = vmatpush.msra.mxu0 %v2163
          %2190 = vmatmul.f32.gmra.mxu0 %v2172
          %v2191 = vpop.f32.mrf.mxu0
          %v2192 = vadd.f32 %v2169, %v2191
          %2193 = vdwg.mxu0
          %2194 = vst [vmem:[#allocation4] sm:$0x3] %v2192
        $region116: #{transformer_classifier.1} parent=107 // pred_fallthru
          _
        // Predicated region
        $region117: #{transformer_classifier.1} parent=107 // pred_check
          %p2195 = pneg %p571
        $region118: #{transformer_classifier.1} parent=107 // pred_check_branch
          %2197 = sbr.rel (%p2195) target = $region120
        $region119: #{transformer_classifier.1} parent=107 // pred_region
          %2199 = vsyncadd [#allocation5], 0
          %s2201 = sshll.u32 [#allocation4], 4
          %s2202 = int_to_ptr.vmem [resolvable:$true] %s2201
          %s2203 = sshll.u32 %s22, 4
          %s2204 = int_to_ptr.hbm [resolvable:$true] %s2203
          %2206 = dma.vmem_to_hbm [thread:$0]  %s2202, 32, %s2204, [#allocation5]
        $region120: #{transformer_classifier.1} parent=107 // pred_fallthru
          _
        // Predicated region
        $region121: #{transformer_classifier.1} parent=107 // pred_check
          %p2207 = pneg %p571
        $region122: #{transformer_classifier.1} parent=107 // pred_check_branch
          %2209 = sbr.rel (%p2207) target = $region124
        $region123: #{transformer_classifier.1} parent=107 // pred_region
          %2211 = dma.done [#allocation5], 32
        $region124: #{transformer_classifier.1} parent=107 // pred_fallthru
          _
      $region108: #{transformer_classifier.1} parent=5 // pred_fallthru
        _
      %p2212 = scmp.le.s32.totalorder 2, %s31
      // Predicated region
      $region125: #{transformer_classifier.1} parent=5 // pred_check
        %p2213 = pneg %p2212
      $region126: #{transformer_classifier.1} parent=5 // pred_check_branch
        %2215 = sbr.rel (%p2213) target = $region128
      $region127: #{transformer_classifier.1} parent=5 // pred_region
        %s2216 = ssub.s32 %s31, 2
      $region128: #{transformer_classifier.1} parent=5 // pred_fallthru
        _
    $region6: #{transformer_classifier.1} parent=1 // loop_footer
      %s35 = sadd.s32 1, %s31
    $region7: #{transformer_classifier.1} parent=1 // loop_footer_branch
      %30 = sbr.rel target = $region3
    $region8: #{transformer_classifier.1} parent=1 // loop_exit
      _
    %2217 = vsyncpa [#allocation5], 1
    %s2218 = scalar_lea.sflag [#allocation5], 1
    %2219 = vsyncpa %s2218, 1

</llo_original>
